<compile_context>
chip_gen: v5e
topology: v5e:2x2
jax: 0.10.0
libtpu: 0.0.40
codegen_flags: <defaults>
</compile_context>

<pallas_src>
import functools

import jax
import jax.numpy as jnp
from jax import lax
from jax.experimental import pallas as pl
from jax.experimental.pallas import tpu as pltpu


def _round_up(x, m):
    return ((x + m - 1) // m) * m


def _vmem_limit_bytes():
    """Generation-aware VMEM limit with a conservative fallback."""
    try:
        cap = pltpu.get_tpu_info().vmem_capacity_bytes
    except Exception:
        cap = 128 * 1024 * 1024
    return min(cap - (8 << 20), 100 * 1024 * 1024)


def contracting_block_kernel(lhs_ref, w1_ref, b1_ref, w2_ref, b2_ref, o_ref,
                             *, W, Wp, Sp):
    # lhs_ref: (1, 1, L1s, 9*Cin)  im2col rows for this strip (halo included)
    # w1_ref : (9*Cin, Cp)         fused conv1 weight
    # b1_ref : (1, Cp)             f32 bias (added to f32 accumulator)
    # w2_ref : (9*Cp, Cp)          fused conv2 weight (tap k = rows k*Cp:(k+1)*Cp)
    # b2_ref : (1, Cp)
    # o_ref  : (1, 1, Sp*Wp, Cp)   flat, lane-dense pooled output for this strip
    Cp = o_ref.shape[-1]
    L2s = 2 * Sp * W                       # conv2 "wide" rows for this strip

    lhs = lhs_ref[0, 0]                    # (L1s, 9*Cin)
    w1 = w1_ref[...]
    w2 = w2_ref[...]
    b1 = b1_ref[...]
    b2 = b2_ref[...]

    # ---- conv1 (3x3 VALID) + ReLU: single matmul, K = 9*Cin ----
    y1 = jnp.dot(lhs, w1, preferred_element_type=jnp.float32)
    y1 = jnp.maximum(y1 + b1, 0.0)         # (L1s, Cp) f32

    # ---- conv2 (3x3 VALID) + ReLU: 9 slab matmuls, K = Cp, f32 accumulate ----
    y1c = y1.astype(w2.dtype)
    acc = None
    for dy in range(3):
        for dx in range(3):
            k = dy * 3 + dx
            off = dy * W + dx
            part = jnp.dot(y1c[off:off + L2s, :],
                           w2[k * Cp:(k + 1) * Cp, :],
                           preferred_element_type=jnp.float32)
            acc = part if acc is None else acc + part
    y2 = jnp.maximum(acc + b2, 0.0)        # (L2s, Cp) f32

    # ---- 2x2 / stride-2 max pool (floor semantics), values only ----
    a = y2.reshape(Sp, 2, W, Cp)                          # [p, row-in-pair, col, c]
    rowmax = jnp.maximum(a[:, 0, :, :], a[:, 1, :, :])    # (Sp, W, Cp)
    b = rowmax[:, :2 * Wp, :].reshape(Sp, Wp, 2, Cp)      # split cols into pairs
    pooled = jnp.maximum(b[:, :, 0, :], b[:, :, 1, :])    # (Sp, Wp, Cp)

    o_ref[0, 0] = pooled.reshape(Sp * Wp, Cp).astype(o_ref.dtype)


def contracting_block(x_nchw, w1_oihw, b1, w2_oihw, b2, *,
                      compute_dtype=None, pooled_rows_per_strip=None):
    """Pallas implementation of Contracting_Block.forward (NCHW in / NCHW out)."""
    N, Cin, H, W = x_nchw.shape
    Cout = w1_oihw.shape[0]
    assert H >= 6 and W >= 6, "Contracting_Block needs H, W >= 6 for a pooled output"

    H2, W2 = H - 4, W - 4
    Hp, Wp = H2 // 2, W2 // 2
    Cp = _round_up(Cout, 128)              # lane-dense channel padding

    # ---- strip sizing (per-strip VMEM ~ 16 * Sp * W * Cp bytes of f32 slabs) ----
    if pooled_rows_per_strip is None:
        budget = 24 << 20
        per_row = 16 * W * Cp
        pooled_rows_per_strip = max(1, budget // per_row)
    Sp = max(1, min(int(pooled_rows_per_strip), Hp))
    n_strips = pl.cdiv(Hp, Sp)
    Hp_pad = n_strips * Sp                 # padded pooled rows (junk sliced later)

    L2s = 2 * Sp * W                       # conv2 wide rows per strip
    L1s = L2s + 2 * W + 2                  # conv1 wide rows per strip (incl. halo)
    L1_total = 2 * Hp_pad * W + 2 * W + 2  # conv1 wide rows overall
    Lx = L1_total + 2 * W + 2              # input flat rows needed

    # ---- layout plumbing (plain XLA ops, outside the kernel) ----
    x_rows = jnp.transpose(x_nchw, (0, 2, 3, 1)).reshape(N, H * W, Cin)
    pad_rows = max(0, Lx - H * W)
    x_rows = jnp.pad(x_rows, ((0, 0), (0, pad_rows), (0, 0)))[:, :Lx, :]

    # im2col LHS: 9 shifted flat-row windows concatenated on the lane axis.
    offs = [dy * W + dx for dy in range(3) for dx in range(3)]
    lhs_full = jnp.concatenate(
        [x_rows[:, o:o + L1_total, :] for o in offs], axis=-1)     # (N, L1_total, 9*Cin)

    # Overlapping strips (4-conv1-row halo materialized once in HBM).
    lhs_strips = jnp.stack(
        [lhs_full[:, 2 * s * Sp * W: 2 * s * Sp * W + L1s, :] for s in range(n_strips)],
        axis=1)                                                    # (N, n_strips, L1s, 9*Cin)

    # Fused im2col weights, channel-padded to Cp lanes.
    w1_t = jnp.transpose(w1_oihw, (2, 3, 1, 0))                    # (3,3,Cin,Cout)
    w1_t = jnp.pad(w1_t, ((0, 0), (0, 0), (0, 0), (0, Cp - Cout)))
    w1_m = w1_t.reshape(9 * Cin, Cp)
    w2_t = jnp.transpose(w2_oihw, (2, 3, 1, 0))                    # (3,3,Cout,Cout)
    w2_t = jnp.pad(w2_t, ((0, 0), (0, 0), (0, Cp - Cout), (0, Cp - Cout)))
    w2_m = w2_t.reshape(9 * Cp, Cp)
    # Biases stay f32: they are added to the f32 accumulator (fine numerically).
    b1_p = jnp.pad(b1, (0, Cp - Cout)).reshape(1, Cp).astype(jnp.float32)
    b2_p = jnp.pad(b2, (0, Cp - Cout)).reshape(1, Cp).astype(jnp.float32)

    if compute_dtype is not None:          # e.g. jnp.bfloat16 on v6e/v7x
        lhs_strips = lhs_strips.astype(compute_dtype)
        w1_m = w1_m.astype(compute_dtype)
        w2_m = w2_m.astype(compute_dtype)

    kernel = functools.partial(contracting_block_kernel, W=W, Wp=Wp, Sp=Sp)

    out_p = pl.pallas_call(
        kernel,
        out_shape=jax.ShapeDtypeStruct((N, n_strips, Sp * Wp, Cp), x_nchw.dtype),
        grid_spec=pltpu.PrefetchScalarGridSpec(
            num_scalar_prefetch=0,
            grid=(N, n_strips),
            in_specs=[
                pl.BlockSpec((1, 1, L1s, 9 * Cin), lambda n, s: (n, s, 0, 0)),
                pl.BlockSpec((9 * Cin, Cp), lambda n, s: (0, 0)),
                pl.BlockSpec((1, Cp), lambda n, s: (0, 0)),
                pl.BlockSpec((9 * Cp, Cp), lambda n, s: (0, 0)),
                pl.BlockSpec((1, Cp), lambda n, s: (0, 0)),
            ],
            out_specs=pl.BlockSpec((1, 1, Sp * Wp, Cp), lambda n, s: (n, s, 0, 0)),
        ),
        compiler_params=pltpu.CompilerParams(
            dimension_semantics=("parallel", "parallel"),
            vmem_limit_bytes=_vmem_limit_bytes(),
        ),
    )(lhs_strips, w1_m, b1_p, w2_m, b2_p)

    out = out_p.reshape(N, Hp_pad, Wp, Cp)[:, :Hp, :, :Cout]   # drop pad rows/channels
    return jnp.transpose(out, (0, 3, 1, 2))                    # back to NCHW


def reference_block(x, w1, b1, w2, b2):
    """Pure-JAX reference matching the PyTorch module exactly (NCHW)."""
    dn = ('NCHW', 'OIHW', 'NCHW')
    y = lax.conv_general_dilated(x, w1, (1, 1), 'VALID', dimension_numbers=dn)
    y = jax.nn.relu(y + b1.reshape(1, -1, 1, 1))
    y = lax.conv_general_dilated(y, w2, (1, 1), 'VALID', dimension_numbers=dn)
    y = jax.nn.relu(y + b2.reshape(1, -1, 1, 1))
    y = lax.reduce_window(y, -jnp.inf, lax.max, (1, 1, 2, 2), (1, 1, 2, 2), 'VALID')
    return y


if __name__ == "__main__":
    key = jax.random.PRNGKey(0)
    k_x, k_w1, k_b1, k_w2, k_b2 = jax.random.split(key, 5)

    N, Cin, Cout, H, W = 2, 4, 8, 16, 16     # small UNet contracting block
    x = jax.random.normal(k_x, (N, Cin, H, W), jnp.float32)

    # Deterministic synthetic parameters (shapes from nn.Conv2d(in, out, 3)).
    w1 = 0.1 * jax.random.normal(k_w1, (Cout, Cin, 3, 3), jnp.float32)
    b1 = 0.1 * jax.random.normal(k_b1, (Cout,), jnp.float32)
    w2 = 0.1 * jax.random.normal(k_w2, (Cout, Cout, 3, 3), jnp.float32)
    b2 = 0.1 * jax.random.normal(k_b2, (Cout,), jnp.float32)

    ref = jax.block_until_ready(reference_block(x, w1, b1, w2, b2))
    expected_shape = (N, Cout, (H - 4) // 2, (W - 4) // 2)
    assert ref.shape == expected_shape

    # f32 path, 2 strips of 4 pooled rows (exercises the padded last strip).
    out = contracting_block(x, w1, b1, w2, b2, pooled_rows_per_strip=4)
    out = jax.block_until_ready(out)
    assert out.shape == expected_shape, out.shape
    err = float(jnp.max(jnp.abs(out - ref)))
    assert err < 1e-3, err

    # bf16-operand path (f32 accumulate/bias/ReLU), 3 exact strips.
    out_bf = contracting_block(x, w1, b1, w2, b2,
                               compute_dtype=jnp.bfloat16,
                               pooled_rows_per_strip=2)
    out_bf = jax.block_until_ready(out_bf)
    err_bf = float(jnp.max(jnp.abs(out_bf - ref)))
    assert err_bf < 6e-2, err_bf

    print("KERNEL_OK")
</pallas_src>

<mosaic_0001>
module attributes {stable_mosaic.version = 11 : i64} {
  func.func @contracting_block_kernel(%arg0: i32, %arg1: i32, %arg2: memref<1x1x162x36xf32, #tpu.memory_space<vmem>>, %arg3: memref<36x128xf32, #tpu.memory_space<vmem>>, %arg4: memref<1x128xf32, #tpu.memory_space<vmem>>, %arg5: memref<1152x128xf32, #tpu.memory_space<vmem>>, %arg6: memref<1x128xf32, #tpu.memory_space<vmem>>, %arg7: memref<1x1x24x128xf32, #tpu.memory_space<vmem>>) attributes {dimension_semantics = [#tpu.dimension_semantics<parallel>, #tpu.dimension_semantics<parallel>], iteration_bounds = array<i64: 2, 2>, scalar_prefetch = 0 : i64, scratch_operands = 0 : i64, tpu.core_type = #tpu.core_type<tc>, window_params = [{transform_indices = @transform_0, window_bounds = array<i64: 1, 1, 162, 36>}, {pipeline_mode = #tpu.pipeline_mode<synchronous>, transform_indices = @transform_1, window_bounds = array<i64: 36, 128>}, {pipeline_mode = #tpu.pipeline_mode<synchronous>, transform_indices = @transform_2, window_bounds = array<i64: 1, 128>}, {pipeline_mode = #tpu.pipeline_mode<synchronous>, transform_indices = @transform_3, window_bounds = array<i64: 1152, 128>}, {pipeline_mode = #tpu.pipeline_mode<synchronous>, transform_indices = @transform_4, window_bounds = array<i64: 1, 128>}, {transform_indices = @transform_5, window_bounds = array<i64: 1, 1, 24, 128>}]} {
    %c0 = arith.constant 0 : index
    %c0_0 = arith.constant 0 : index
    %c0_1 = arith.constant 0 : index
    %c0_2 = arith.constant 0 : index
    %0 = vector.load %arg2[%c0, %c0_0, %c0_1, %c0_2] : memref<1x1x162x36xf32, #tpu.memory_space<vmem>>, vector<1x1x162x36xf32>
    %1 = vector.shape_cast %0 : vector<1x1x162x36xf32> to vector<162x36xf32>
    %c0_3 = arith.constant 0 : index
    %c0_4 = arith.constant 0 : index
    %2 = vector.load %arg3[%c0_3, %c0_4] : memref<36x128xf32, #tpu.memory_space<vmem>>, vector<36x128xf32>
    %c0_5 = arith.constant 0 : index
    %c0_6 = arith.constant 0 : index
    %3 = vector.load %arg5[%c0_5, %c0_6] : memref<1152x128xf32, #tpu.memory_space<vmem>>, vector<1152x128xf32>
    %c0_7 = arith.constant 0 : index
    %c0_8 = arith.constant 0 : index
    %4 = vector.load %arg4[%c0_7, %c0_8] : memref<1x128xf32, #tpu.memory_space<vmem>>, vector<1x128xf32>
    %c0_9 = arith.constant 0 : index
    %c0_10 = arith.constant 0 : index
    %5 = vector.load %arg6[%c0_9, %c0_10] : memref<1x128xf32, #tpu.memory_space<vmem>>, vector<1x128xf32>
    %cst = arith.constant dense<0.000000e+00> : vector<162x128xf32>
    %6 = tpu.matmul %1, %2, %cst {dimension_numbers = #tpu.dot_dimension_numbers<[1], [0], [0], [1], [0, 0, 1, 1], [], []>} : vector<162x36xf32>, vector<36x128xf32>, vector<162x128xf32> -> vector<162x128xf32>
    %7 = vector.broadcast %4 : vector<1x128xf32> to vector<162x128xf32>
    %8 = arith.addf %6, %7 : vector<162x128xf32>
    %cst_11 = arith.constant 0.000000e+00 : f32
    %9 = vector.broadcast %cst_11 : f32 to vector<162x128xf32>
    %10 = arith.maximumf %8, %9 : vector<162x128xf32>
    %11 = vector.extract_strided_slice %10 {offsets = [0, 0], sizes = [128, 128], strides = [1, 1]} : vector<162x128xf32> to vector<128x128xf32>
    %12 = vector.extract_strided_slice %3 {offsets = [0, 0], sizes = [128, 128], strides = [1, 1]} : vector<1152x128xf32> to vector<128x128xf32>
    %cst_12 = arith.constant dense<0.000000e+00> : vector<128x128xf32>
    %13 = tpu.matmul %11, %12, %cst_12 {dimension_numbers = #tpu.dot_dimension_numbers<[1], [0], [0], [1], [0, 0, 1, 1], [], []>} : vector<128x128xf32>, vector<128x128xf32>, vector<128x128xf32> -> vector<128x128xf32>
    %14 = vector.extract_strided_slice %10 {offsets = [1, 0], sizes = [128, 128], strides = [1, 1]} : vector<162x128xf32> to vector<128x128xf32>
    %15 = vector.extract_strided_slice %3 {offsets = [128, 0], sizes = [128, 128], strides = [1, 1]} : vector<1152x128xf32> to vector<128x128xf32>
    %cst_13 = arith.constant dense<0.000000e+00> : vector<128x128xf32>
    %16 = tpu.matmul %14, %15, %cst_13 {dimension_numbers = #tpu.dot_dimension_numbers<[1], [0], [0], [1], [0, 0, 1, 1], [], []>} : vector<128x128xf32>, vector<128x128xf32>, vector<128x128xf32> -> vector<128x128xf32>
    %17 = arith.addf %13, %16 : vector<128x128xf32>
    %18 = vector.extract_strided_slice %10 {offsets = [2, 0], sizes = [128, 128], strides = [1, 1]} : vector<162x128xf32> to vector<128x128xf32>
    %19 = vector.extract_strided_slice %3 {offsets = [256, 0], sizes = [128, 128], strides = [1, 1]} : vector<1152x128xf32> to vector<128x128xf32>
    %cst_14 = arith.constant dense<0.000000e+00> : vector<128x128xf32>
    %20 = tpu.matmul %18, %19, %cst_14 {dimension_numbers = #tpu.dot_dimension_numbers<[1], [0], [0], [1], [0, 0, 1, 1], [], []>} : vector<128x128xf32>, vector<128x128xf32>, vector<128x128xf32> -> vector<128x128xf32>
    %21 = arith.addf %17, %20 : vector<128x128xf32>
    %22 = vector.extract_strided_slice %10 {offsets = [16, 0], sizes = [128, 128], strides = [1, 1]} : vector<162x128xf32> to vector<128x128xf32>
    %23 = vector.extract_strided_slice %3 {offsets = [384, 0], sizes = [128, 128], strides = [1, 1]} : vector<1152x128xf32> to vector<128x128xf32>
    %cst_15 = arith.constant dense<0.000000e+00> : vector<128x128xf32>
    %24 = tpu.matmul %22, %23, %cst_15 {dimension_numbers = #tpu.dot_dimension_numbers<[1], [0], [0], [1], [0, 0, 1, 1], [], []>} : vector<128x128xf32>, vector<128x128xf32>, vector<128x128xf32> -> vector<128x128xf32>
    %25 = arith.addf %21, %24 : vector<128x128xf32>
    %26 = vector.extract_strided_slice %10 {offsets = [17, 0], sizes = [128, 128], strides = [1, 1]} : vector<162x128xf32> to vector<128x128xf32>
    %27 = vector.extract_strided_slice %3 {offsets = [512, 0], sizes = [128, 128], strides = [1, 1]} : vector<1152x128xf32> to vector<128x128xf32>
    %cst_16 = arith.constant dense<0.000000e+00> : vector<128x128xf32>
    %28 = tpu.matmul %26, %27, %cst_16 {dimension_numbers = #tpu.dot_dimension_numbers<[1], [0], [0], [1], [0, 0, 1, 1], [], []>} : vector<128x128xf32>, vector<128x128xf32>, vector<128x128xf32> -> vector<128x128xf32>
    %29 = arith.addf %25, %28 : vector<128x128xf32>
    %30 = vector.extract_strided_slice %10 {offsets = [18, 0], sizes = [128, 128], strides = [1, 1]} : vector<162x128xf32> to vector<128x128xf32>
    %31 = vector.extract_strided_slice %3 {offsets = [640, 0], sizes = [128, 128], strides = [1, 1]} : vector<1152x128xf32> to vector<128x128xf32>
    %cst_17 = arith.constant dense<0.000000e+00> : vector<128x128xf32>
    %32 = tpu.matmul %30, %31, %cst_17 {dimension_numbers = #tpu.dot_dimension_numbers<[1], [0], [0], [1], [0, 0, 1, 1], [], []>} : vector<128x128xf32>, vector<128x128xf32>, vector<128x128xf32> -> vector<128x128xf32>
    %33 = arith.addf %29, %32 : vector<128x128xf32>
    %34 = vector.extract_strided_slice %10 {offsets = [32, 0], sizes = [128, 128], strides = [1, 1]} : vector<162x128xf32> to vector<128x128xf32>
    %35 = vector.extract_strided_slice %3 {offsets = [768, 0], sizes = [128, 128], strides = [1, 1]} : vector<1152x128xf32> to vector<128x128xf32>
    %cst_18 = arith.constant dense<0.000000e+00> : vector<128x128xf32>
    %36 = tpu.matmul %34, %35, %cst_18 {dimension_numbers = #tpu.dot_dimension_numbers<[1], [0], [0], [1], [0, 0, 1, 1], [], []>} : vector<128x128xf32>, vector<128x128xf32>, vector<128x128xf32> -> vector<128x128xf32>
    %37 = arith.addf %33, %36 : vector<128x128xf32>
    %38 = vector.extract_strided_slice %10 {offsets = [33, 0], sizes = [128, 128], strides = [1, 1]} : vector<162x128xf32> to vector<128x128xf32>
    %39 = vector.extract_strided_slice %3 {offsets = [896, 0], sizes = [128, 128], strides = [1, 1]} : vector<1152x128xf32> to vector<128x128xf32>
    %cst_19 = arith.constant dense<0.000000e+00> : vector<128x128xf32>
    %40 = tpu.matmul %38, %39, %cst_19 {dimension_numbers = #tpu.dot_dimension_numbers<[1], [0], [0], [1], [0, 0, 1, 1], [], []>} : vector<128x128xf32>, vector<128x128xf32>, vector<128x128xf32> -> vector<128x128xf32>
    %41 = arith.addf %37, %40 : vector<128x128xf32>
    %42 = vector.extract_strided_slice %10 {offsets = [34, 0], sizes = [128, 128], strides = [1, 1]} : vector<162x128xf32> to vector<128x128xf32>
    %43 = vector.extract_strided_slice %3 {offsets = [1024, 0], sizes = [128, 128], strides = [1, 1]} : vector<1152x128xf32> to vector<128x128xf32>
    %cst_20 = arith.constant dense<0.000000e+00> : vector<128x128xf32>
    %44 = tpu.matmul %42, %43, %cst_20 {dimension_numbers = #tpu.dot_dimension_numbers<[1], [0], [0], [1], [0, 0, 1, 1], [], []>} : vector<128x128xf32>, vector<128x128xf32>, vector<128x128xf32> -> vector<128x128xf32>
    %45 = arith.addf %41, %44 : vector<128x128xf32>
    %46 = vector.broadcast %5 : vector<1x128xf32> to vector<128x128xf32>
    %47 = arith.addf %45, %46 : vector<128x128xf32>
    %cst_21 = arith.constant 0.000000e+00 : f32
    %48 = vector.broadcast %cst_21 : f32 to vector<128x128xf32>
    %49 = arith.maximumf %47, %48 : vector<128x128xf32>
    %50 = vector.shape_cast %49 : vector<128x128xf32> to vector<4x2x16x128xf32>
    %51 = vector.extract_strided_slice %50 {offsets = [0, 0, 0, 0], sizes = [4, 1, 16, 128], strides = [1, 1, 1, 1]} : vector<4x2x16x128xf32> to vector<4x1x16x128xf32>
    %52 = vector.shape_cast %51 : vector<4x1x16x128xf32> to vector<4x16x128xf32>
    %53 = vector.extract_strided_slice %50 {offsets = [0, 1, 0, 0], sizes = [4, 1, 16, 128], strides = [1, 1, 1, 1]} : vector<4x2x16x128xf32> to vector<4x1x16x128xf32>
    %54 = vector.shape_cast %53 : vector<4x1x16x128xf32> to vector<4x16x128xf32>
    %55 = arith.maximumf %52, %54 : vector<4x16x128xf32>
    %56 = vector.extract_strided_slice %55 {offsets = [0, 0, 0], sizes = [4, 12, 128], strides = [1, 1, 1]} : vector<4x16x128xf32> to vector<4x12x128xf32>
    %57 = vector.shape_cast %56 : vector<4x12x128xf32> to vector<4x6x2x128xf32>
    %58 = vector.extract_strided_slice %57 {offsets = [0, 0, 0, 0], sizes = [4, 6, 1, 128], strides = [1, 1, 1, 1]} : vector<4x6x2x128xf32> to vector<4x6x1x128xf32>
    %59 = vector.shape_cast %58 : vector<4x6x1x128xf32> to vector<4x6x128xf32>
    %60 = vector.extract_strided_slice %57 {offsets = [0, 0, 1, 0], sizes = [4, 6, 1, 128], strides = [1, 1, 1, 1]} : vector<4x6x2x128xf32> to vector<4x6x1x128xf32>
    %61 = vector.shape_cast %60 : vector<4x6x1x128xf32> to vector<4x6x128xf32>
    %62 = arith.maximumf %59, %61 : vector<4x6x128xf32>
    %63 = vector.shape_cast %62 : vector<4x6x128xf32> to vector<24x128xf32>
    %c0_22 = arith.constant 0 : index
    %c0_23 = arith.constant 0 : index
    %c0_24 = arith.constant 0 : index
    %c0_25 = arith.constant 0 : index
    %64 = vector.load %arg7[%c0_22, %c0_23, %c0_24, %c0_25] : memref<1x1x24x128xf32, #tpu.memory_space<vmem>>, vector<1x1x24x128xf32>
    %65 = vector.shape_cast %64 : vector<1x1x24x128xf32> to vector<24x128xf32>
    %66 = vector.shape_cast %63 : vector<24x128xf32> to vector<1x1x24x128xf32>
    tpu.vector_store %arg7[%c0_22, %c0_23, %c0_24, %c0_25], %66 {strides = array<i32>} : memref<1x1x24x128xf32, #tpu.memory_space<vmem>>, vector<1x1x24x128xf32>,
    return
  }
  func.func @transform_0(%arg0: i32, %arg1: i32) -> (i32, i32, i32, i32) {
    %c0_i32 = arith.constant 0 : i32
    %c0_i32_0 = arith.constant 0 : i32
    %c0_i32_1 = arith.constant 0 : i32
    return %arg0, %arg1, %c0_i32, %c0_i32_0 : i32, i32, i32, i32
  }
  func.func @transform_1(%arg0: i32, %arg1: i32) -> (i32, i32) {
    %c0_i32 = arith.constant 0 : i32
    %c0_i32_0 = arith.constant 0 : i32
    %c0_i32_1 = arith.constant 0 : i32
    return %c0_i32, %c0_i32_0 : i32, i32
  }
  func.func @transform_2(%arg0: i32, %arg1: i32) -> (i32, i32) {
    %c0_i32 = arith.constant 0 : i32
    %c0_i32_0 = arith.constant 0 : i32
    %c0_i32_1 = arith.constant 0 : i32
    return %c0_i32, %c0_i32_0 : i32, i32
  }
  func.func @transform_3(%arg0: i32, %arg1: i32) -> (i32, i32) {
    %c0_i32 = arith.constant 0 : i32
    %c0_i32_0 = arith.constant 0 : i32
    %c0_i32_1 = arith.constant 0 : i32
    return %c0_i32, %c0_i32_0 : i32, i32
  }
  func.func @transform_4(%arg0: i32, %arg1: i32) -> (i32, i32) {
    %c0_i32 = arith.constant 0 : i32
    %c0_i32_0 = arith.constant 0 : i32
    %c0_i32_1 = arith.constant 0 : i32
    return %c0_i32, %c0_i32_0 : i32, i32
  }
  func.func @transform_5(%arg0: i32, %arg1: i32) -> (i32, i32, i32, i32) {
    %c0_i32 = arith.constant 0 : i32
    %c0_i32_0 = arith.constant 0 : i32
    %c0_i32_1 = arith.constant 0 : i32
    return %arg0, %arg1, %c0_i32, %c0_i32_0 : i32, i32, i32, i32
  }
}

</mosaic_0001>

<llo_original>
// kernel: tpu_custom_call.1
$region0: #{tpu_custom_call.1}
  #allocation0 [shape = 'u32[]', space=smem, size = 0x4, offset = 0x4, fixed_abs, tag = 'smem constant byte address 0x4 - core index']
  #allocation1 [shape = 'u32[72,128]{1,0:T(1,128)}', space=vmem, size = 0x9000, scoped, tag = 'internal scratch']
  %s0 = inlined_call_operand.vmem [shape: f32[2,2,162,36], index: 0, kind: input, shape index: {}]
  %s1 = inlined_call_operand.vmem [shape: f32[36,128], index: 1, kind: input, shape index: {}]
  %s2 = inlined_call_operand.vmem [shape: f32[1,128], index: 2, kind: input, shape index: {}]
  %s3 = inlined_call_operand.hbm [shape: f32[1152,128], index: 3, kind: input, shape index: {}]
  %s4 = inlined_call_operand.vmem [shape: f32[1,128], index: 4, kind: input, shape index: {}]
  %s5 = inlined_call_operand.hbm [shape: f32[2,2,24,128], index: 5, kind: output, shape index: {}]
  %s6 = sld [smem:[#allocation0]]
  $region57: #{tpu_custom_call.1} parent=0
    _
  %s8 = ssub.s32 1, %s6
  %s9 = scalar_select 0, %s8, %s6
  $region1: #{tpu_custom_call.1} parent=0
    #allocation2 [shape = 'u8[589824]{0}', space=vmem, size = 0x90000, scoped, tag = 'input window, operand 3, single buffered']
    #allocation3 [shape = 's32[2]{0}', space=sflag, size = 0x8, scoped, tag = 'scoped memory for tpu_custom_call.1']
    #allocation4 [shape = 's32[2]{0}', space=sflag, size = 0x8, scoped, tag = 'scoped memory for tpu_custom_call.1']
    #allocation5 [shape = 'u8[24576]{0}', space=vmem, size = 0x6000, scoped, tag = 'output window, operand 0']
    %10 = vsyncpa [#allocation3], 0
    %11 = vsyncpa [#allocation4], 0
    %s12 = scalar_lea.sflag [#allocation4], 1
    %13 = vsyncpa %s12, 0
    loop: start=0, step=1, limit=6
    $region2: #{tpu_custom_call.1} parent=1 // loop_pre_header
      _
    $region3: #{tpu_custom_call.1} parent=1 // loop_header
      %s15 = sphi 0, %s19
      %p16 = scmp.ge.s32.totalorder %s15, 6
      %s22 = sphi 0, %s34
      %s23 = sphi 0, %s30
      %s24 = sphi 0, %s22
      %s25 = sphi 0, %s23
      %s26 = sphi 0, %s24
      %s27 = sphi 0, %s25
      %s39 = sphi 0, %s41
      %s42 = sphi 0, %s39
      %s43 = sphi 0, %s42
      %s59 = sphi 0, %s43
      %s63 = sphi 0, %s63
      %s65 = sphi 0, %s63
      %s66 = sphi 0, %s65
      %s80 = sphi 0, %s66
      %s84 = sphi 0, %s84
      %s86 = sphi 0, %s84
      %s87 = sphi 0, %s86
      %s101 = sphi 0, %s87
      %s105 = sphi 0, %s105
      %s107 = sphi 0, %s105
      %s108 = sphi 0, %s107
      %s122 = sphi 0, %s108
      %s126 = sphi 0, %s126
      %s128 = sphi 0, %s126
      %s129 = sphi 0, %s128
      %s143 = sphi 0, %s129
      %s151 = sphi 0, %s153
      %s154 = sphi 0, %s151
      %s155 = sphi 0, %s154
      %s171 = sphi 0, %s155
    $region4: #{tpu_custom_call.1} parent=1 // loop_header_branch
      %18 = sbr.rel (%p16) target = $region8
    $region5: #{tpu_custom_call.1} parent=1 // loop_body
      %s20 = ssub.s32 %s15, 1
      %s21 = ssub.s32 %s15, 2
      %s28 = sadd.s32 1, %s23
      %p29 = scmp.ge.s32.totalorder %s28, 2
      %s30 = scalar_select %p29, 0, %s28
      %s31 = sadd.s32 1, %s22
      %s32 = scalar_select %p29, %s31, %s22
      %p33 = scmp.ge.s32.totalorder %s32, 2
      %s34 = scalar_select %p33, 0, %s32
      %s35 = ssub.s32 %s22, %s34
      %s36 = ssub.s32 %s23, %s30
      %s37 = sor.u32 %s35, %s36
      %p38 = scmp.eq.s32.totalorder %s37, 0
      %s40 = sadd.s32 %s39, 1
      %s41 = scalar_select %p38, %s39, %s40
      %p44 = pneg %p38
      %p45 = scmp.eq.s32.totalorder %s15, 3
      %p46 = por %p44, %p45
      %p47 = scmp.ne.s32.totalorder %s39, %s42
      %p48 = scmp.eq.s32.totalorder %s15, 0
      %p49 = por %p47, %p48
      %p50 = scmp.ne.s32.totalorder %s39, %s42
      %p51 = scmp.eq.s32.totalorder %s20, 3
      %p52 = por %p50, %p51
      %p53 = scmp.ne.s32.totalorder %s42, %s43
      %p54 = scmp.eq.s32.totalorder %s20, 0
      %p55 = por %p53, %p54
      %p56 = scmp.ne.s32.totalorder %s42, %s43
      %p57 = scmp.eq.s32.totalorder %s21, 3
      %p58 = por %p56, %p57
      %p60 = scmp.ne.s32.totalorder %s43, %s59
      %p61 = scmp.eq.s32.totalorder %s21, 0
      %p62 = por %p60, %p61
      %s64 = sadd.s32 %s63, 1
      %p67 = scmp.eq.s32.totalorder %s15, 3
      %p68 = scmp.ne.s32.totalorder %s63, %s65
      %p69 = scmp.eq.s32.totalorder %s15, 0
      %p70 = por %p68, %p69
      %p71 = scmp.ne.s32.totalorder %s63, %s65
      %p72 = scmp.eq.s32.totalorder %s20, 3
      %p73 = por %p71, %p72
      %p74 = scmp.ne.s32.totalorder %s65, %s66
      %p75 = scmp.eq.s32.totalorder %s20, 0
      %p76 = por %p74, %p75
      %p77 = scmp.ne.s32.totalorder %s65, %s66
      %p78 = scmp.eq.s32.totalorder %s21, 3
      %p79 = por %p77, %p78
      %p81 = scmp.ne.s32.totalorder %s66, %s80
      %p82 = scmp.eq.s32.totalorder %s21, 0
      %p83 = por %p81, %p82
      %s85 = sadd.s32 %s84, 1
      %p88 = scmp.eq.s32.totalorder %s15, 3
      %p89 = scmp.ne.s32.totalorder %s84, %s86
      %p90 = scmp.eq.s32.totalorder %s15, 0
      %p91 = por %p89, %p90
      %p92 = scmp.ne.s32.totalorder %s84, %s86
      %p93 = scmp.eq.s32.totalorder %s20, 3
      %p94 = por %p92, %p93
      %p95 = scmp.ne.s32.totalorder %s86, %s87
      %p96 = scmp.eq.s32.totalorder %s20, 0
      %p97 = por %p95, %p96
      %p98 = scmp.ne.s32.totalorder %s86, %s87
      %p99 = scmp.eq.s32.totalorder %s21, 3
      %p100 = por %p98, %p99
      %p102 = scmp.ne.s32.totalorder %s87, %s101
      %p103 = scmp.eq.s32.totalorder %s21, 0
      %p104 = por %p102, %p103
      %s106 = sadd.s32 %s105, 1
      %p109 = scmp.eq.s32.totalorder %s15, 3
      %p110 = scmp.ne.s32.totalorder %s105, %s107
      %p111 = scmp.eq.s32.totalorder %s15, 0
      %p112 = por %p110, %p111
      %p113 = scmp.ne.s32.totalorder %s105, %s107
      %p114 = scmp.eq.s32.totalorder %s20, 3
      %p115 = por %p113, %p114
      %p116 = scmp.ne.s32.totalorder %s107, %s108
      %p117 = scmp.eq.s32.totalorder %s20, 0
      %p118 = por %p116, %p117
      %p119 = scmp.ne.s32.totalorder %s107, %s108
      %p120 = scmp.eq.s32.totalorder %s21, 3
      %p121 = por %p119, %p120
      %p123 = scmp.ne.s32.totalorder %s108, %s122
      %p124 = scmp.eq.s32.totalorder %s21, 0
      %p125 = por %p123, %p124
      %s127 = sadd.s32 %s126, 1
      %p130 = scmp.eq.s32.totalorder %s15, 3
      %p131 = scmp.ne.s32.totalorder %s126, %s128
      %p132 = scmp.eq.s32.totalorder %s15, 0
      %p133 = por %p131, %p132
      %p134 = scmp.ne.s32.totalorder %s126, %s128
      %p135 = scmp.eq.s32.totalorder %s20, 3
      %p136 = por %p134, %p135
      %p137 = scmp.ne.s32.totalorder %s128, %s129
      %p138 = scmp.eq.s32.totalorder %s20, 0
      %p139 = por %p137, %p138
      %p140 = scmp.ne.s32.totalorder %s128, %s129
      %p141 = scmp.eq.s32.totalorder %s21, 3
      %p142 = por %p140, %p141
      %p144 = scmp.ne.s32.totalorder %s129, %s143
      %p145 = scmp.eq.s32.totalorder %s21, 0
      %p146 = por %p144, %p145
      %s147 = ssub.s32 %s22, %s34
      %s148 = ssub.s32 %s23, %s30
      %s149 = sor.u32 %s147, %s148
      %p150 = scmp.eq.s32.totalorder %s149, 0
      %s152 = sadd.s32 %s151, 1
      %s153 = scalar_select %p150, %s151, %s152
      %p156 = pneg %p150
      %p157 = scmp.eq.s32.totalorder %s15, 3
      %p158 = por %p156, %p157
      %p159 = scmp.ne.s32.totalorder %s151, %s154
      %p160 = scmp.eq.s32.totalorder %s15, 0
      %p161 = por %p159, %p160
      %p162 = scmp.ne.s32.totalorder %s151, %s154
      %p163 = scmp.eq.s32.totalorder %s20, 3
      %p164 = por %p162, %p163
      %p165 = scmp.ne.s32.totalorder %s154, %s155
      %p166 = scmp.eq.s32.totalorder %s20, 0
      %p167 = por %p165, %p166
      %p168 = scmp.ne.s32.totalorder %s154, %s155
      %p169 = scmp.eq.s32.totalorder %s21, 3
      %p170 = por %p168, %p169
      %p172 = scmp.ne.s32.totalorder %s155, %s171
      %p173 = scmp.eq.s32.totalorder %s21, 0
      %p174 = por %p172, %p173
      %p175 = scmp.le.s32.totalorder 1, %s15
      %p176 = scmp.lt.s32.totalorder %s15, 5
      %p177 = pnand %p175, %p176
      %p178 = pneg %p177
      // Predicated region
      $region9: #{tpu_custom_call.1} parent=5 // pred_check
        _
      $region10: #{tpu_custom_call.1} parent=5 // pred_check_branch
        %180 = sbr.rel (%p177) target = $region12
      $region11: #{tpu_custom_call.1} parent=5 // pred_region
        %s181 = ssub.s32 %s15, 1
        // Predicated region
        $region13: #{tpu_custom_call.1} parent=11 // pred_check
          %p182 = pneg %p76
        $region14: #{tpu_custom_call.1} parent=11 // pred_check_branch
          %184 = sbr.rel (%p182) target = $region16
        $region15: #{tpu_custom_call.1} parent=11 // pred_region
          _
        $region16: #{tpu_custom_call.1} parent=11 // pred_fallthru
          _
        // Predicated region
        $region17: #{tpu_custom_call.1} parent=11 // pred_check
          %p185 = pneg %p97
        $region18: #{tpu_custom_call.1} parent=11 // pred_check_branch
          %187 = sbr.rel (%p185) target = $region20
        $region19: #{tpu_custom_call.1} parent=11 // pred_region
          _
        $region20: #{tpu_custom_call.1} parent=11 // pred_fallthru
          _
        // Predicated region
        $region21: #{tpu_custom_call.1} parent=11 // pred_check
          %p188 = pneg %p118
        $region22: #{tpu_custom_call.1} parent=11 // pred_check_branch
          %190 = sbr.rel (%p188) target = $region24
        $region23: #{tpu_custom_call.1} parent=11 // pred_region
          %192 = vsyncadd [#allocation3], 0
          %s193 = sshll.u32 %s3, 4
          %s194 = int_to_ptr.hbm [resolvable:$true] %s193
          %s195 = sshll.u32 [#allocation2], 4
          %s196 = int_to_ptr.vmem [resolvable:$true] %s195
          %201 = dma.hbm_to_vmem [thread:$0]  %s194, 18432, %s196, [#allocation3], 128, 128, 8
        $region24: #{tpu_custom_call.1} parent=11 // pred_fallthru
          _
        // Predicated region
        $region25: #{tpu_custom_call.1} parent=11 // pred_check
          %p202 = pneg %p139
        $region26: #{tpu_custom_call.1} parent=11 // pred_check_branch
          %204 = sbr.rel (%p202) target = $region28
        $region27: #{tpu_custom_call.1} parent=11 // pred_region
          _
        $region28: #{tpu_custom_call.1} parent=11 // pred_fallthru
          _
      $region12: #{tpu_custom_call.1} parent=5 // pred_fallthru
        _
      %p205 = scmp.lt.s32.totalorder %s15, 4
      // Predicated region
      $region29: #{tpu_custom_call.1} parent=5 // pred_check
        %p206 = pneg %p205
      $region30: #{tpu_custom_call.1} parent=5 // pred_check_branch
        %208 = sbr.rel (%p206) target = $region32
      $region31: #{tpu_custom_call.1} parent=5 // pred_region
        // Predicated region
        $region33: #{tpu_custom_call.1} parent=31 // pred_check
          %p209 = pneg %p49
        $region34: #{tpu_custom_call.1} parent=31 // pred_check_branch
          %211 = sbr.rel (%p209) target = $region36
        $region35: #{tpu_custom_call.1} parent=31 // pred_region
          %p212 = scmp.lt.s32.totalorder %s22, 1
          %s213 = scalar_select %p212, %s22, 1
          %p214 = scmp.lt.s32.totalorder %s23, 1
          %s215 = scalar_select %p214, %s23, 1
          %s216 = smul.addr %s215, 21
          %s217 = smul.addr %s213, 42
          %s218 = sadd.s32 %s216, %s217
          %s219 = smul.addr %s218, 8
          %s220 = scalar_lea.vmem %s0, %s219
        $region36: #{tpu_custom_call.1} parent=31 // pred_fallthru
          _
      $region32: #{tpu_custom_call.1} parent=5 // pred_fallthru
        _
      %p221 = scmp.le.s32.totalorder 1, %s15
      %p222 = scmp.lt.s32.totalorder %s15, 5
      %p223 = pnand %p221, %p222
      %p224 = pneg %p223
      // Predicated region
      $region37: #{tpu_custom_call.1} parent=5 // pred_check
        _
      $region38: #{tpu_custom_call.1} parent=5 // pred_check_branch
        %226 = sbr.rel (%p223) target = $region40
      $region39: #{tpu_custom_call.1} parent=5 // pred_region
        %s227 = ssub.s32 %s15, 1
        // Predicated region
        $region41: #{tpu_custom_call.1} parent=39 // pred_check
          %p228 = pneg %p118
        $region42: #{tpu_custom_call.1} parent=39 // pred_check_branch
          %230 = sbr.rel (%p228) target = $region44
        $region43: #{tpu_custom_call.1} parent=39 // pred_region
          %232 = dma.done [#allocation3], 18432
        $region44: #{tpu_custom_call.1} parent=39 // pred_fallthru
          _
        %p233 = scmp.lt.s32.totalorder %s24, 1
        %s234 = scalar_select %p233, %s24, 1
        %p235 = scmp.lt.s32.totalorder %s25, 1
        %s236 = scalar_select %p235, %s25, 1
        %s237 = smul.addr %s236, 21
        %s238 = smul.addr %s234, 42
        %s239 = sadd.s32 %s237, %s238
        %s240 = smul.addr %s239, 8
        %s241 = scalar_lea.vmem %s0, %s240
        %p242 = pneg %p55
        %p243 = pneg %p52
        %p244 = pneg %p76
        %p245 = pneg %p73
        %p246 = pneg %p97
        %p247 = pneg %p94
        %p248 = pneg %p118
        %p249 = pneg %p115
        %p250 = pneg %p139
        %p251 = pneg %p136
        %p252 = pneg %p167
        %p253 = pneg %p164
        %s254 = sand.u32 %s154, 1
        %s255 = scalar_lea.sflag [#allocation4], %s254
        %s256 = sand.u32 %s154, 1
        %s257 = smul.addr %s256, 24
        %s258 = scalar_lea.vmem [#allocation5], %s257
        %p259 = scmp.lt.s32.totalorder %s24, 1
        %s260 = scalar_select %p259, %s24, 1
        %p261 = scmp.lt.s32.totalorder %s25, 1
        %s262 = scalar_select %p261, %s25, 1
        %s263 = smul.addr %s262, 21
        %s264 = smul.addr %s260, 42
        %s265 = sadd.s32 %s263, %s264
        %s266 = smul.addr %s265, 8
        %s267 = scalar_lea.vmem %s0, %s266
        %v268 = vld [vmem:[%s267] sm:$0xff]
        %v269 = vld [vmem:[%s267 + $0x8] sm:$0xff]
        %v270 = vld [vmem:[%s267 + $0x10] sm:$0xff]
        %v271 = vld [vmem:[%s267 + $0x18] sm:$0xff]
        %v272 = vld [vmem:[%s267 + $0x20] sm:$0xff]
        %v273 = vld [vmem:[%s267 + $0x28] sm:$0xff]
        %v274 = vld [vmem:[%s267 + $0x30] sm:$0xff]
        %v275 = vld [vmem:[%s267 + $0x38] sm:$0xff]
        %v276 = vld [vmem:[%s267 + $0x40] sm:$0xff]
        %v277 = vld [vmem:[%s267 + $0x48] sm:$0xff]
        %v278 = vld [vmem:[%s267 + $0x50] sm:$0xff]
        %v279 = vld [vmem:[%s267 + $0x58] sm:$0xff]
        %v280 = vld [vmem:[%s267 + $0x60] sm:$0xff]
        %v281 = vld [vmem:[%s267 + $0x68] sm:$0xff]
        %v282 = vld [vmem:[%s267 + $0x70] sm:$0xff]
        %v283 = vld [vmem:[%s267 + $0x78] sm:$0xff]
        %v284 = vld [vmem:[%s267 + $0x80] sm:$0xff]
        %v285 = vld [vmem:[%s267 + $0x88] sm:$0xff]
        %v286 = vld [vmem:[%s267 + $0x90] sm:$0xff]
        %v287 = vld [vmem:[%s267 + $0x98] sm:$0xff]
        %v288 = vld [vmem:[%s267 + $0xa0] sm:$0x3]
        %v289 = vld [vmem:[%s1] sm:$0xff]
        %v290 = vld [vmem:[%s1 + $0x8] sm:$0xff]
        %v291 = vld [vmem:[%s1 + $0x10] sm:$0xff]
        %v292 = vld [vmem:[%s1 + $0x18] sm:$0xff]
        %v293 = vld [vmem:[%s1 + $0x20] sm:$0xf]
        %v294 = vld [vmem:[#allocation2] sm:$0xff]
        %v295 = vld [vmem:[#allocation2 + $0x8] sm:$0xff]
        %v296 = vld [vmem:[#allocation2 + $0x10] sm:$0xff]
        %v297 = vld [vmem:[#allocation2 + $0x18] sm:$0xff]
        %v298 = vld [vmem:[#allocation2 + $0x20] sm:$0xff]
        %v299 = vld [vmem:[#allocation2 + $0x28] sm:$0xff]
        %v300 = vld [vmem:[#allocation2 + $0x30] sm:$0xff]
        %v301 = vld [vmem:[#allocation2 + $0x38] sm:$0xff]
        %v302 = vld [vmem:[#allocation2 + $0x40] sm:$0xff]
        %v303 = vld [vmem:[#allocation2 + $0x48] sm:$0xff]
        %v304 = vld [vmem:[#allocation2 + $0x50] sm:$0xff]
        %v305 = vld [vmem:[#allocation2 + $0x58] sm:$0xff]
        %v306 = vld [vmem:[#allocation2 + $0x60] sm:$0xff]
        %v307 = vld [vmem:[#allocation2 + $0x68] sm:$0xff]
        %v308 = vld [vmem:[#allocation2 + $0x70] sm:$0xff]
        %v309 = vld [vmem:[#allocation2 + $0x78] sm:$0xff]
        %v310 = vld [vmem:[#allocation2 + $0x80] sm:$0xff]
        %v311 = vld [vmem:[#allocation2 + $0x88] sm:$0xff]
        %v312 = vld [vmem:[#allocation2 + $0x90] sm:$0xff]
        %v313 = vld [vmem:[#allocation2 + $0x98] sm:$0xff]
        %v314 = vld [vmem:[#allocation2 + $0xa0] sm:$0xff]
        %v315 = vld [vmem:[#allocation2 + $0xa8] sm:$0xff]
        %v316 = vld [vmem:[#allocation2 + $0xb0] sm:$0xff]
        %v317 = vld [vmem:[#allocation2 + $0xb8] sm:$0xff]
        %v318 = vld [vmem:[#allocation2 + $0xc0] sm:$0xff]
        %v319 = vld [vmem:[#allocation2 + $0xc8] sm:$0xff]
        %v320 = vld [vmem:[#allocation2 + $0xd0] sm:$0xff]
        %v321 = vld [vmem:[#allocation2 + $0xd8] sm:$0xff]
        %v322 = vld [vmem:[#allocation2 + $0xe0] sm:$0xff]
        %v323 = vld [vmem:[#allocation2 + $0xe8] sm:$0xff]
        %v324 = vld [vmem:[#allocation2 + $0xf0] sm:$0xff]
        %v325 = vld [vmem:[#allocation2 + $0xf8] sm:$0xff]
        %v326 = vld [vmem:[#allocation2 + $0x100] sm:$0xff]
        %v327 = vld [vmem:[#allocation2 + $0x108] sm:$0xff]
        %v328 = vld [vmem:[#allocation2 + $0x110] sm:$0xff]
        %v329 = vld [vmem:[#allocation2 + $0x118] sm:$0xff]
        %v330 = vld [vmem:[#allocation2 + $0x120] sm:$0xff]
        %v331 = vld [vmem:[#allocation2 + $0x128] sm:$0xff]
        %v332 = vld [vmem:[#allocation2 + $0x130] sm:$0xff]
        %v333 = vld [vmem:[#allocation2 + $0x138] sm:$0xff]
        %v334 = vld [vmem:[#allocation2 + $0x140] sm:$0xff]
        %v335 = vld [vmem:[#allocation2 + $0x148] sm:$0xff]
        %v336 = vld [vmem:[#allocation2 + $0x150] sm:$0xff]
        %v337 = vld [vmem:[#allocation2 + $0x158] sm:$0xff]
        %v338 = vld [vmem:[#allocation2 + $0x160] sm:$0xff]
        %v339 = vld [vmem:[#allocation2 + $0x168] sm:$0xff]
        %v340 = vld [vmem:[#allocation2 + $0x170] sm:$0xff]
        %v341 = vld [vmem:[#allocation2 + $0x178] sm:$0xff]
        %v342 = vld [vmem:[#allocation2 + $0x180] sm:$0xff]
        %v343 = vld [vmem:[#allocation2 + $0x188] sm:$0xff]
        %v344 = vld [vmem:[#allocation2 + $0x190] sm:$0xff]
        %v345 = vld [vmem:[#allocation2 + $0x198] sm:$0xff]
        %v346 = vld [vmem:[#allocation2 + $0x1a0] sm:$0xff]
        %v347 = vld [vmem:[#allocation2 + $0x1a8] sm:$0xff]
        %v348 = vld [vmem:[#allocation2 + $0x1b0] sm:$0xff]
        %v349 = vld [vmem:[#allocation2 + $0x1b8] sm:$0xff]
        %v350 = vld [vmem:[#allocation2 + $0x1c0] sm:$0xff]
        %v351 = vld [vmem:[#allocation2 + $0x1c8] sm:$0xff]
        %v352 = vld [vmem:[#allocation2 + $0x1d0] sm:$0xff]
        %v353 = vld [vmem:[#allocation2 + $0x1d8] sm:$0xff]
        %v354 = vld [vmem:[#allocation2 + $0x1e0] sm:$0xff]
        %v355 = vld [vmem:[#allocation2 + $0x1e8] sm:$0xff]
        %v356 = vld [vmem:[#allocation2 + $0x1f0] sm:$0xff]
        %v357 = vld [vmem:[#allocation2 + $0x1f8] sm:$0xff]
        %v358 = vld [vmem:[#allocation2 + $0x200] sm:$0xff]
        %v359 = vld [vmem:[#allocation2 + $0x208] sm:$0xff]
        %v360 = vld [vmem:[#allocation2 + $0x210] sm:$0xff]
        %v361 = vld [vmem:[#allocation2 + $0x218] sm:$0xff]
        %v362 = vld [vmem:[#allocation2 + $0x220] sm:$0xff]
        %v363 = vld [vmem:[#allocation2 + $0x228] sm:$0xff]
        %v364 = vld [vmem:[#allocation2 + $0x230] sm:$0xff]
        %v365 = vld [vmem:[#allocation2 + $0x238] sm:$0xff]
        %v366 = vld [vmem:[#allocation2 + $0x240] sm:$0xff]
        %v367 = vld [vmem:[#allocation2 + $0x248] sm:$0xff]
        %v368 = vld [vmem:[#allocation2 + $0x250] sm:$0xff]
        %v369 = vld [vmem:[#allocation2 + $0x258] sm:$0xff]
        %v370 = vld [vmem:[#allocation2 + $0x260] sm:$0xff]
        %v371 = vld [vmem:[#allocation2 + $0x268] sm:$0xff]
        %v372 = vld [vmem:[#allocation2 + $0x270] sm:$0xff]
        %v373 = vld [vmem:[#allocation2 + $0x278] sm:$0xff]
        %v374 = vld [vmem:[#allocation2 + $0x280] sm:$0xff]
        %v375 = vld [vmem:[#allocation2 + $0x288] sm:$0xff]
        %v376 = vld [vmem:[#allocation2 + $0x290] sm:$0xff]
        %v377 = vld [vmem:[#allocation2 + $0x298] sm:$0xff]
        %v378 = vld [vmem:[#allocation2 + $0x2a0] sm:$0xff]
        %v379 = vld [vmem:[#allocation2 + $0x2a8] sm:$0xff]
        %v380 = vld [vmem:[#allocation2 + $0x2b0] sm:$0xff]
        %v381 = vld [vmem:[#allocation2 + $0x2b8] sm:$0xff]
        %v382 = vld [vmem:[#allocation2 + $0x2c0] sm:$0xff]
        %v383 = vld [vmem:[#allocation2 + $0x2c8] sm:$0xff]
        %v384 = vld [vmem:[#allocation2 + $0x2d0] sm:$0xff]
        %v385 = vld [vmem:[#allocation2 + $0x2d8] sm:$0xff]
        %v386 = vld [vmem:[#allocation2 + $0x2e0] sm:$0xff]
        %v387 = vld [vmem:[#allocation2 + $0x2e8] sm:$0xff]
        %v388 = vld [vmem:[#allocation2 + $0x2f0] sm:$0xff]
        %v389 = vld [vmem:[#allocation2 + $0x2f8] sm:$0xff]
        %v390 = vld [vmem:[#allocation2 + $0x300] sm:$0xff]
        %v391 = vld [vmem:[#allocation2 + $0x308] sm:$0xff]
        %v392 = vld [vmem:[#allocation2 + $0x310] sm:$0xff]
        %v393 = vld [vmem:[#allocation2 + $0x318] sm:$0xff]
        %v394 = vld [vmem:[#allocation2 + $0x320] sm:$0xff]
        %v395 = vld [vmem:[#allocation2 + $0x328] sm:$0xff]
        %v396 = vld [vmem:[#allocation2 + $0x330] sm:$0xff]
        %v397 = vld [vmem:[#allocation2 + $0x338] sm:$0xff]
        %v398 = vld [vmem:[#allocation2 + $0x340] sm:$0xff]
        %v399 = vld [vmem:[#allocation2 + $0x348] sm:$0xff]
        %v400 = vld [vmem:[#allocation2 + $0x350] sm:$0xff]
        %v401 = vld [vmem:[#allocation2 + $0x358] sm:$0xff]
        %v402 = vld [vmem:[#allocation2 + $0x360] sm:$0xff]
        %v403 = vld [vmem:[#allocation2 + $0x368] sm:$0xff]
        %v404 = vld [vmem:[#allocation2 + $0x370] sm:$0xff]
        %v405 = vld [vmem:[#allocation2 + $0x378] sm:$0xff]
        %v406 = vld [vmem:[#allocation2 + $0x380] sm:$0xff]
        %v407 = vld [vmem:[#allocation2 + $0x388] sm:$0xff]
        %v408 = vld [vmem:[#allocation2 + $0x390] sm:$0xff]
        %v409 = vld [vmem:[#allocation2 + $0x398] sm:$0xff]
        %v410 = vld [vmem:[#allocation2 + $0x3a0] sm:$0xff]
        %v411 = vld [vmem:[#allocation2 + $0x3a8] sm:$0xff]
        %v412 = vld [vmem:[#allocation2 + $0x3b0] sm:$0xff]
        %v413 = vld [vmem:[#allocation2 + $0x3b8] sm:$0xff]
        %v414 = vld [vmem:[#allocation2 + $0x3c0] sm:$0xff]
        %v415 = vld [vmem:[#allocation2 + $0x3c8] sm:$0xff]
        %v416 = vld [vmem:[#allocation2 + $0x3d0] sm:$0xff]
        %v417 = vld [vmem:[#allocation2 + $0x3d8] sm:$0xff]
        %v418 = vld [vmem:[#allocation2 + $0x3e0] sm:$0xff]
        %v419 = vld [vmem:[#allocation2 + $0x3e8] sm:$0xff]
        %v420 = vld [vmem:[#allocation2 + $0x3f0] sm:$0xff]
        %v421 = vld [vmem:[#allocation2 + $0x3f8] sm:$0xff]
        %v422 = vld [vmem:[#allocation2 + $0x400] sm:$0xff]
        %v423 = vld [vmem:[#allocation2 + $0x408] sm:$0xff]
        %v424 = vld [vmem:[#allocation2 + $0x410] sm:$0xff]
        %v425 = vld [vmem:[#allocation2 + $0x418] sm:$0xff]
        %v426 = vld [vmem:[#allocation2 + $0x420] sm:$0xff]
        %v427 = vld [vmem:[#allocation2 + $0x428] sm:$0xff]
        %v428 = vld [vmem:[#allocation2 + $0x430] sm:$0xff]
        %v429 = vld [vmem:[#allocation2 + $0x438] sm:$0xff]
        %v430 = vld [vmem:[#allocation2 + $0x440] sm:$0xff]
        %v431 = vld [vmem:[#allocation2 + $0x448] sm:$0xff]
        %v432 = vld [vmem:[#allocation2 + $0x450] sm:$0xff]
        %v433 = vld [vmem:[#allocation2 + $0x458] sm:$0xff]
        %v434 = vld [vmem:[#allocation2 + $0x460] sm:$0xff]
        %v435 = vld [vmem:[#allocation2 + $0x468] sm:$0xff]
        %v436 = vld [vmem:[#allocation2 + $0x470] sm:$0xff]
        %v437 = vld [vmem:[#allocation2 + $0x478] sm:$0xff]
        %v438 = vld [vmem:[%s2] sm:$0x1]
        %v439 = vld [vmem:[%s4] sm:$0x1]
        %v441 = vperm.slane %v438, 0
        %vm443 = vcmask 293888
        %v445 = vsel %vm443, %v268, 0
        %v448 = vsel %vm443, %v269, 0
        %v451 = vsel %vm443, %v270, 0
        %v454 = vsel %vm443, %v271, 0
        %v457 = vsel %vm443, %v272, 0
        %v460 = vsel %vm443, %v273, 0
        %v463 = vsel %vm443, %v274, 0
        %v466 = vsel %vm443, %v275, 0
        %v469 = vsel %vm443, %v276, 0
        %v472 = vsel %vm443, %v277, 0
        %v475 = vsel %vm443, %v278, 0
        %v478 = vsel %vm443, %v279, 0
        %v481 = vsel %vm443, %v280, 0
        %v484 = vsel %vm443, %v281, 0
        %v487 = vsel %vm443, %v282, 0
        %v490 = vsel %vm443, %v283, 0
        %v493 = vsel %vm443, %v284, 0
        %v496 = vsel %vm443, %v285, 0
        %v499 = vsel %vm443, %v286, 0
        %v502 = vsel %vm443, %v287, 0
        %v505 = vsel %vm443, %v288, 0
        %vm507 = vcmask 1043456
        %v509 = vsel %vm507, %v293, 0
        %511 = vmatpush.msra.mxu0 0.0
        %512 = vmatpush.msra.mxu0 0.0
        %513 = vmatpush.msra.mxu0 0.0
        %514 = vmatpush.msra.mxu0 0.0
        %515 = vmatpush.msra.mxu0 0.0
        %516 = vmatpush.msra.mxu0 0.0
        %517 = vmatpush.msra.mxu0 0.0
        %518 = vmatpush.msra.mxu0 0.0
        %519 = vmatpush.msra.mxu0 0.0
        %520 = vmatpush.msra.mxu0 0.0
        %521 = vmatpush.msra.mxu0 0.0
        %522 = vmatpush.msra.mxu0 %v509
        %523 = vmatpush.msra.mxu0 %v292
        %524 = vmatpush.msra.mxu0 %v291
        %525 = vmatpush.msra.mxu0 %v290
        %526 = vmatpush.msra.mxu0 %v289
        %527 = vmatmul.f32.gmra.mxu0 %v445
        %v528 = vpop.f32.mrf.mxu0
        %v529 = vadd.f32 %v441, %v528
        %530 = vmatmul.f32.gmra.mxu0 %v448
        %v531 = vpop.f32.mrf.mxu0
        %v532 = vadd.f32 %v441, %v531
        %533 = vmatmul.f32.gmra.mxu0 %v451
        %v534 = vpop.f32.mrf.mxu0
        %v535 = vadd.f32 %v441, %v534
        %536 = vmatmul.f32.gmra.mxu0 %v454
        %v537 = vpop.f32.mrf.mxu0
        %v538 = vadd.f32 %v441, %v537
        %539 = vmatmul.f32.gmra.mxu0 %v457
        %v540 = vpop.f32.mrf.mxu0
        %v541 = vadd.f32 %v441, %v540
        %542 = vmatmul.f32.gmra.mxu0 %v460
        %v543 = vpop.f32.mrf.mxu0
        %v544 = vadd.f32 %v441, %v543
        %545 = vmatmul.f32.gmra.mxu0 %v463
        %v546 = vpop.f32.mrf.mxu0
        %v547 = vadd.f32 %v441, %v546
        %548 = vmatmul.f32.gmra.mxu0 %v466
        %v549 = vpop.f32.mrf.mxu0
        %v550 = vadd.f32 %v441, %v549
        %551 = vmatmul.f32.gmra.mxu0 %v469
        %v552 = vpop.f32.mrf.mxu0
        %v553 = vadd.f32 %v441, %v552
        %554 = vmatmul.f32.gmra.mxu0 %v472
        %v555 = vpop.f32.mrf.mxu0
        %v556 = vadd.f32 %v441, %v555
        %557 = vmatmul.f32.gmra.mxu0 %v475
        %v558 = vpop.f32.mrf.mxu0
        %v559 = vadd.f32 %v441, %v558
        %560 = vmatmul.f32.gmra.mxu0 %v478
        %v561 = vpop.f32.mrf.mxu0
        %v562 = vadd.f32 %v441, %v561
        %563 = vmatmul.f32.gmra.mxu0 %v481
        %v564 = vpop.f32.mrf.mxu0
        %v565 = vadd.f32 %v441, %v564
        %566 = vmatmul.f32.gmra.mxu0 %v484
        %v567 = vpop.f32.mrf.mxu0
        %v568 = vadd.f32 %v441, %v567
        %569 = vmatmul.f32.gmra.mxu0 %v487
        %v570 = vpop.f32.mrf.mxu0
        %v571 = vadd.f32 %v441, %v570
        %572 = vmatmul.f32.gmra.mxu0 %v490
        %v573 = vpop.f32.mrf.mxu0
        %v574 = vadd.f32 %v441, %v573
        %575 = vmatmul.f32.gmra.mxu0 %v493
        %v576 = vpop.f32.mrf.mxu0
        %v577 = vadd.f32 %v441, %v576
        %578 = vmatmul.f32.gmra.mxu0 %v496
        %v579 = vpop.f32.mrf.mxu0
        %v580 = vadd.f32 %v441, %v579
        %581 = vmatmul.f32.gmra.mxu0 %v499
        %v582 = vpop.f32.mrf.mxu0
        %v583 = vadd.f32 %v441, %v582
        %584 = vmatmul.f32.gmra.mxu0 %v502
        %v585 = vpop.f32.mrf.mxu0
        %v586 = vadd.f32 %v441, %v585
        %587 = vmatmul.f32.gmra.mxu0 %v505
        %v588 = vpop.f32.mrf.mxu0
        %v589 = vadd.f32 %v441, %v588
        %590 = vdwg.mxu0
        %v591 = vmax.f32 %v529, 0.0
        %v592 = vmax.f32 %v532, 0.0
        %v593 = vmax.f32 %v535, 0.0
        %v594 = vmax.f32 %v538, 0.0
        %v595 = vmax.f32 %v541, 0.0
        %v596 = vmax.f32 %v544, 0.0
        %v597 = vmax.f32 %v547, 0.0
        %v598 = vmax.f32 %v550, 0.0
        %v599 = vmax.f32 %v553, 0.0
        %v600 = vmax.f32 %v556, 0.0
        %v601 = vmax.f32 %v559, 0.0
        %v602 = vmax.f32 %v562, 0.0
        %v603 = vmax.f32 %v565, 0.0
        %v604 = vmax.f32 %v568, 0.0
        %v605 = vmax.f32 %v571, 0.0
        %v606 = vmax.f32 %v574, 0.0
        %v607 = vmax.f32 %v577, 0.0
        %v608 = vmax.f32 %v580, 0.0
        %v609 = vmax.f32 %v583, 0.0
        %v610 = vmax.f32 %v586, 0.0
        %v611 = vmax.f32 %v589, 0.0
        %vm629 = vcmask 1046528
        %v630 = vrot.slane %v591, 1
        %v631 = vrot.slane %v592, 1
        %v632 = vsel %vm629, %v630, %v631
        %v633 = vrot.slane %v593, 1
        %v634 = vsel %vm629, %v631, %v633
        %v635 = vrot.slane %v594, 1
        %v636 = vsel %vm629, %v633, %v635
        %v637 = vrot.slane %v595, 1
        %v638 = vsel %vm629, %v635, %v637
        %v639 = vrot.slane %v596, 1
        %v640 = vsel %vm629, %v637, %v639
        %v641 = vrot.slane %v597, 1
        %v642 = vsel %vm629, %v639, %v641
        %v643 = vrot.slane %v598, 1
        %v644 = vsel %vm629, %v641, %v643
        %v645 = vrot.slane %v599, 1
        %v646 = vsel %vm629, %v643, %v645
        %v647 = vrot.slane %v600, 1
        %v648 = vsel %vm629, %v645, %v647
        %v649 = vrot.slane %v601, 1
        %v650 = vsel %vm629, %v647, %v649
        %v651 = vrot.slane %v602, 1
        %v652 = vsel %vm629, %v649, %v651
        %v653 = vrot.slane %v603, 1
        %v654 = vsel %vm629, %v651, %v653
        %v655 = vrot.slane %v604, 1
        %v656 = vsel %vm629, %v653, %v655
        %v657 = vrot.slane %v605, 1
        %v658 = vsel %vm629, %v655, %v657
        %v659 = vrot.slane %v606, 1
        %v660 = vsel %vm629, %v657, %v659
        %v661 = vrot.slane %v607, 1
        %v662 = vsel %vm629, %v659, %v661
        %679 = vmatpush.msra.mxu0 %v325
        %680 = vmatpush.msra.mxu0 %v324
        %681 = vmatpush.msra.mxu0 %v323
        %682 = vmatpush.msra.mxu0 %v322
        %683 = vmatpush.msra.mxu0 %v321
        %684 = vmatpush.msra.mxu0 %v320
        %685 = vmatpush.msra.mxu0 %v319
        %686 = vmatpush.msra.mxu0 %v318
        %687 = vmatpush.msra.mxu0 %v317
        %688 = vmatpush.msra.mxu0 %v316
        %689 = vmatpush.msra.mxu0 %v315
        %690 = vmatpush.msra.mxu0 %v314
        %691 = vmatpush.msra.mxu0 %v313
        %692 = vmatpush.msra.mxu0 %v312
        %693 = vmatpush.msra.mxu0 %v311
        %694 = vmatpush.msra.mxu0 %v310
        %695 = vmatmul.f32.gmra.mxu0 %v632
        %v696 = vpop.f32.mrf.mxu0
        %v697 = vadd.f32 0.0, %v696
        %698 = vmatmul.f32.gmra.mxu0 %v634
        %v699 = vpop.f32.mrf.mxu0
        %v700 = vadd.f32 0.0, %v699
        %701 = vmatmul.f32.gmra.mxu0 %v636
        %v702 = vpop.f32.mrf.mxu0
        %v703 = vadd.f32 0.0, %v702
        %704 = vmatmul.f32.gmra.mxu0 %v638
        %v705 = vpop.f32.mrf.mxu0
        %v706 = vadd.f32 0.0, %v705
        %707 = vmatmul.f32.gmra.mxu0 %v640
        %v708 = vpop.f32.mrf.mxu0
        %v709 = vadd.f32 0.0, %v708
        %710 = vmatmul.f32.gmra.mxu0 %v642
        %v711 = vpop.f32.mrf.mxu0
        %v712 = vadd.f32 0.0, %v711
        %713 = vmatmul.f32.gmra.mxu0 %v644
        %v714 = vpop.f32.mrf.mxu0
        %v715 = vadd.f32 0.0, %v714
        %716 = vmatmul.f32.gmra.mxu0 %v646
        %v717 = vpop.f32.mrf.mxu0
        %v718 = vadd.f32 0.0, %v717
        %719 = vmatmul.f32.gmra.mxu0 %v648
        %v720 = vpop.f32.mrf.mxu0
        %v721 = vadd.f32 0.0, %v720
        %722 = vmatmul.f32.gmra.mxu0 %v650
        %v723 = vpop.f32.mrf.mxu0
        %v724 = vadd.f32 0.0, %v723
        %725 = vmatmul.f32.gmra.mxu0 %v652
        %v726 = vpop.f32.mrf.mxu0
        %v727 = vadd.f32 0.0, %v726
        %728 = vmatmul.f32.gmra.mxu0 %v654
        %v729 = vpop.f32.mrf.mxu0
        %v730 = vadd.f32 0.0, %v729
        %731 = vmatmul.f32.gmra.mxu0 %v656
        %v732 = vpop.f32.mrf.mxu0
        %v733 = vadd.f32 0.0, %v732
        %734 = vmatmul.f32.gmra.mxu0 %v658
        %v735 = vpop.f32.mrf.mxu0
        %v736 = vadd.f32 0.0, %v735
        %737 = vmatmul.f32.gmra.mxu0 %v660
        %v738 = vpop.f32.mrf.mxu0
        %v739 = vadd.f32 0.0, %v738
        %740 = vmatmul.f32.gmra.mxu0 %v662
        %v741 = vpop.f32.mrf.mxu0
        %v742 = vadd.f32 0.0, %v741
        %743 = vdwg.mxu0
        %744 = vmatpush.msra.mxu0 %v309
        %745 = vmatpush.msra.mxu0 %v308
        %746 = vmatpush.msra.mxu0 %v307
        %747 = vmatpush.msra.mxu0 %v306
        %748 = vmatpush.msra.mxu0 %v305
        %749 = vmatpush.msra.mxu0 %v304
        %750 = vmatpush.msra.mxu0 %v303
        %751 = vmatpush.msra.mxu0 %v302
        %752 = vmatpush.msra.mxu0 %v301
        %753 = vmatpush.msra.mxu0 %v300
        %754 = vmatpush.msra.mxu0 %v299
        %755 = vmatpush.msra.mxu0 %v298
        %756 = vmatpush.msra.mxu0 %v297
        %757 = vmatpush.msra.mxu0 %v296
        %758 = vmatpush.msra.mxu0 %v295
        %759 = vmatpush.msra.mxu0 %v294
        %760 = vmatmul.f32.gmra.mxu0 %v591
        %v761 = vpop.f32.mrf.mxu0
        %v762 = vadd.f32 %v697, %v761
        %763 = vmatmul.f32.gmra.mxu0 %v592
        %v764 = vpop.f32.mrf.mxu0
        %v765 = vadd.f32 %v700, %v764
        %766 = vmatmul.f32.gmra.mxu0 %v593
        %v767 = vpop.f32.mrf.mxu0
        %v768 = vadd.f32 %v703, %v767
        %769 = vmatmul.f32.gmra.mxu0 %v594
        %v770 = vpop.f32.mrf.mxu0
        %v771 = vadd.f32 %v706, %v770
        %772 = vmatmul.f32.gmra.mxu0 %v595
        %v773 = vpop.f32.mrf.mxu0
        %v774 = vadd.f32 %v709, %v773
        %775 = vmatmul.f32.gmra.mxu0 %v596
        %v776 = vpop.f32.mrf.mxu0
        %v777 = vadd.f32 %v712, %v776
        %778 = vmatmul.f32.gmra.mxu0 %v597
        %v779 = vpop.f32.mrf.mxu0
        %v780 = vadd.f32 %v715, %v779
        %781 = vmatmul.f32.gmra.mxu0 %v598
        %v782 = vpop.f32.mrf.mxu0
        %v783 = vadd.f32 %v718, %v782
        %784 = vmatmul.f32.gmra.mxu0 %v599
        %v785 = vpop.f32.mrf.mxu0
        %v786 = vadd.f32 %v721, %v785
        %787 = vmatmul.f32.gmra.mxu0 %v600
        %v788 = vpop.f32.mrf.mxu0
        %v789 = vadd.f32 %v724, %v788
        %790 = vmatmul.f32.gmra.mxu0 %v601
        %v791 = vpop.f32.mrf.mxu0
        %v792 = vadd.f32 %v727, %v791
        %793 = vmatmul.f32.gmra.mxu0 %v602
        %v794 = vpop.f32.mrf.mxu0
        %v795 = vadd.f32 %v730, %v794
        %796 = vmatmul.f32.gmra.mxu0 %v603
        %v797 = vpop.f32.mrf.mxu0
        %v798 = vadd.f32 %v733, %v797
        %799 = vmatmul.f32.gmra.mxu0 %v604
        %v800 = vpop.f32.mrf.mxu0
        %v801 = vadd.f32 %v736, %v800
        %802 = vmatmul.f32.gmra.mxu0 %v605
        %v803 = vpop.f32.mrf.mxu0
        %v804 = vadd.f32 %v739, %v803
        %805 = vmatmul.f32.gmra.mxu0 %v606
        %v806 = vpop.f32.mrf.mxu0
        %v807 = vadd.f32 %v742, %v806
        %808 = vdwg.mxu0
        %vm809 = vcmask 1045504
        %v810 = vrot.slane %v591, 2
        %v811 = vrot.slane %v592, 2
        %v812 = vsel %vm809, %v810, %v811
        %v813 = vrot.slane %v593, 2
        %v814 = vsel %vm809, %v811, %v813
        %v815 = vrot.slane %v594, 2
        %v816 = vsel %vm809, %v813, %v815
        %v817 = vrot.slane %v595, 2
        %v818 = vsel %vm809, %v815, %v817
        %v819 = vrot.slane %v596, 2
        %v820 = vsel %vm809, %v817, %v819
        %v821 = vrot.slane %v597, 2
        %v822 = vsel %vm809, %v819, %v821
        %v823 = vrot.slane %v598, 2
        %v824 = vsel %vm809, %v821, %v823
        %v825 = vrot.slane %v599, 2
        %v826 = vsel %vm809, %v823, %v825
        %v827 = vrot.slane %v600, 2
        %v828 = vsel %vm809, %v825, %v827
        %v829 = vrot.slane %v601, 2
        %v830 = vsel %vm809, %v827, %v829
        %v831 = vrot.slane %v602, 2
        %v832 = vsel %vm809, %v829, %v831
        %v833 = vrot.slane %v603, 2
        %v834 = vsel %vm809, %v831, %v833
        %v835 = vrot.slane %v604, 2
        %v836 = vsel %vm809, %v833, %v835
        %v837 = vrot.slane %v605, 2
        %v838 = vsel %vm809, %v835, %v837
        %v839 = vrot.slane %v606, 2
        %v840 = vsel %vm809, %v837, %v839
        %v841 = vrot.slane %v607, 2
        %v842 = vsel %vm809, %v839, %v841
        %859 = vmatpush.msra.mxu0 %v341
        %860 = vmatpush.msra.mxu0 %v340
        %861 = vmatpush.msra.mxu0 %v339
        %862 = vmatpush.msra.mxu0 %v338
        %863 = vmatpush.msra.mxu0 %v337
        %864 = vmatpush.msra.mxu0 %v336
        %865 = vmatpush.msra.mxu0 %v335
        %866 = vmatpush.msra.mxu0 %v334
        %867 = vmatpush.msra.mxu0 %v333
        %868 = vmatpush.msra.mxu0 %v332
        %869 = vmatpush.msra.mxu0 %v331
        %870 = vmatpush.msra.mxu0 %v330
        %871 = vmatpush.msra.mxu0 %v329
        %872 = vmatpush.msra.mxu0 %v328
        %873 = vmatpush.msra.mxu0 %v327
        %874 = vmatpush.msra.mxu0 %v326
        %875 = vmatmul.f32.gmra.mxu0 %v812
        %v876 = vpop.f32.mrf.mxu0
        %v877 = vadd.f32 0.0, %v876
        %878 = vmatmul.f32.gmra.mxu0 %v814
        %v879 = vpop.f32.mrf.mxu0
        %v880 = vadd.f32 0.0, %v879
        %881 = vmatmul.f32.gmra.mxu0 %v816
        %v882 = vpop.f32.mrf.mxu0
        %v883 = vadd.f32 0.0, %v882
        %884 = vmatmul.f32.gmra.mxu0 %v818
        %v885 = vpop.f32.mrf.mxu0
        %v886 = vadd.f32 0.0, %v885
        %887 = vmatmul.f32.gmra.mxu0 %v820
        %v888 = vpop.f32.mrf.mxu0
        %v889 = vadd.f32 0.0, %v888
        %890 = vmatmul.f32.gmra.mxu0 %v822
        %v891 = vpop.f32.mrf.mxu0
        %v892 = vadd.f32 0.0, %v891
        %893 = vmatmul.f32.gmra.mxu0 %v824
        %v894 = vpop.f32.mrf.mxu0
        %v895 = vadd.f32 0.0, %v894
        %896 = vmatmul.f32.gmra.mxu0 %v826
        %v897 = vpop.f32.mrf.mxu0
        %v898 = vadd.f32 0.0, %v897
        %899 = vmatmul.f32.gmra.mxu0 %v828
        %v900 = vpop.f32.mrf.mxu0
        %v901 = vadd.f32 0.0, %v900
        %902 = vmatmul.f32.gmra.mxu0 %v830
        %v903 = vpop.f32.mrf.mxu0
        %v904 = vadd.f32 0.0, %v903
        %905 = vmatmul.f32.gmra.mxu0 %v832
        %v906 = vpop.f32.mrf.mxu0
        %v907 = vadd.f32 0.0, %v906
        %908 = vmatmul.f32.gmra.mxu0 %v834
        %v909 = vpop.f32.mrf.mxu0
        %v910 = vadd.f32 0.0, %v909
        %911 = vmatmul.f32.gmra.mxu0 %v836
        %v912 = vpop.f32.mrf.mxu0
        %v913 = vadd.f32 0.0, %v912
        %914 = vmatmul.f32.gmra.mxu0 %v838
        %v915 = vpop.f32.mrf.mxu0
        %v916 = vadd.f32 0.0, %v915
        %917 = vmatmul.f32.gmra.mxu0 %v840
        %v918 = vpop.f32.mrf.mxu0
        %v919 = vadd.f32 0.0, %v918
        %920 = vmatmul.f32.gmra.mxu0 %v842
        %v921 = vpop.f32.mrf.mxu0
        %v922 = vadd.f32 0.0, %v921
        %923 = vdwg.mxu0
        %v924 = vadd.f32 %v762, %v877
        %v925 = vadd.f32 %v765, %v880
        %v926 = vadd.f32 %v768, %v883
        %v927 = vadd.f32 %v771, %v886
        %v928 = vadd.f32 %v774, %v889
        %v929 = vadd.f32 %v777, %v892
        %v930 = vadd.f32 %v780, %v895
        %v931 = vadd.f32 %v783, %v898
        %v932 = vadd.f32 %v786, %v901
        %v933 = vadd.f32 %v789, %v904
        %v934 = vadd.f32 %v792, %v907
        %v935 = vadd.f32 %v795, %v910
        %v936 = vadd.f32 %v798, %v913
        %v937 = vadd.f32 %v801, %v916
        %v938 = vadd.f32 %v804, %v919
        %v939 = vadd.f32 %v807, %v922
        %940 = vmatpush.msra.mxu0 %v357
        %941 = vmatpush.msra.mxu0 %v356
        %942 = vmatpush.msra.mxu0 %v355
        %943 = vmatpush.msra.mxu0 %v354
        %944 = vmatpush.msra.mxu0 %v353
        %945 = vmatpush.msra.mxu0 %v352
        %946 = vmatpush.msra.mxu0 %v351
        %947 = vmatpush.msra.mxu0 %v350
        %948 = vmatpush.msra.mxu0 %v349
        %949 = vmatpush.msra.mxu0 %v348
        %950 = vmatpush.msra.mxu0 %v347
        %951 = vmatpush.msra.mxu0 %v346
        %952 = vmatpush.msra.mxu0 %v345
        %953 = vmatpush.msra.mxu0 %v344
        %954 = vmatpush.msra.mxu0 %v343
        %955 = vmatpush.msra.mxu0 %v342
        %956 = vmatmul.f32.gmra.mxu0 %v593
        %v957 = vpop.f32.mrf.mxu0
        %v958 = vadd.f32 0.0, %v957
        %959 = vmatmul.f32.gmra.mxu0 %v594
        %v960 = vpop.f32.mrf.mxu0
        %v961 = vadd.f32 0.0, %v960
        %962 = vmatmul.f32.gmra.mxu0 %v595
        %v963 = vpop.f32.mrf.mxu0
        %v964 = vadd.f32 0.0, %v963
        %965 = vmatmul.f32.gmra.mxu0 %v596
        %v966 = vpop.f32.mrf.mxu0
        %v967 = vadd.f32 0.0, %v966
        %968 = vmatmul.f32.gmra.mxu0 %v597
        %v969 = vpop.f32.mrf.mxu0
        %v970 = vadd.f32 0.0, %v969
        %971 = vmatmul.f32.gmra.mxu0 %v598
        %v972 = vpop.f32.mrf.mxu0
        %v973 = vadd.f32 0.0, %v972
        %974 = vmatmul.f32.gmra.mxu0 %v599
        %v975 = vpop.f32.mrf.mxu0
        %v976 = vadd.f32 0.0, %v975
        %977 = vmatmul.f32.gmra.mxu0 %v600
        %v978 = vpop.f32.mrf.mxu0
        %v979 = vadd.f32 0.0, %v978
        %980 = vmatmul.f32.gmra.mxu0 %v601
        %v981 = vpop.f32.mrf.mxu0
        %v982 = vadd.f32 0.0, %v981
        %983 = vmatmul.f32.gmra.mxu0 %v602
        %v984 = vpop.f32.mrf.mxu0
        %v985 = vadd.f32 0.0, %v984
        %986 = vmatmul.f32.gmra.mxu0 %v603
        %v987 = vpop.f32.mrf.mxu0
        %v988 = vadd.f32 0.0, %v987
        %989 = vmatmul.f32.gmra.mxu0 %v604
        %v990 = vpop.f32.mrf.mxu0
        %v991 = vadd.f32 0.0, %v990
        %992 = vmatmul.f32.gmra.mxu0 %v605
        %v993 = vpop.f32.mrf.mxu0
        %v994 = vadd.f32 0.0, %v993
        %995 = vmatmul.f32.gmra.mxu0 %v606
        %v996 = vpop.f32.mrf.mxu0
        %v997 = vadd.f32 0.0, %v996
        %998 = vmatmul.f32.gmra.mxu0 %v607
        %v999 = vpop.f32.mrf.mxu0
        %v1000 = vadd.f32 0.0, %v999
        %1001 = vmatmul.f32.gmra.mxu0 %v608
        %v1002 = vpop.f32.mrf.mxu0
        %v1003 = vadd.f32 0.0, %v1002
        %1004 = vdwg.mxu0
        %v1005 = vadd.f32 %v924, %v958
        %v1006 = vadd.f32 %v925, %v961
        %v1007 = vadd.f32 %v926, %v964
        %v1008 = vadd.f32 %v927, %v967
        %v1009 = vadd.f32 %v928, %v970
        %v1010 = vadd.f32 %v929, %v973
        %v1011 = vadd.f32 %v930, %v976
        %v1012 = vadd.f32 %v931, %v979
        %v1013 = vadd.f32 %v932, %v982
        %v1014 = vadd.f32 %v933, %v985
        %v1015 = vadd.f32 %v934, %v988
        %v1016 = vadd.f32 %v935, %v991
        %v1017 = vadd.f32 %v936, %v994
        %v1018 = vadd.f32 %v937, %v997
        %v1019 = vadd.f32 %v938, %v1000
        %v1020 = vadd.f32 %v939, %v1003
        %v1023 = vrot.slane %v608, 1
        %v1024 = vsel %vm629, %v661, %v1023
        %v1025 = vrot.slane %v609, 1
        %v1026 = vsel %vm629, %v1023, %v1025
        %1029 = vmatpush.msra.mxu0 %v373
        %1030 = vmatpush.msra.mxu0 %v372
        %1031 = vmatpush.msra.mxu0 %v371
        %1032 = vmatpush.msra.mxu0 %v370
        %1033 = vmatpush.msra.mxu0 %v369
        %1034 = vmatpush.msra.mxu0 %v368
        %1035 = vmatpush.msra.mxu0 %v367
        %1036 = vmatpush.msra.mxu0 %v366
        %1037 = vmatpush.msra.mxu0 %v365
        %1038 = vmatpush.msra.mxu0 %v364
        %1039 = vmatpush.msra.mxu0 %v363
        %1040 = vmatpush.msra.mxu0 %v362
        %1041 = vmatpush.msra.mxu0 %v361
        %1042 = vmatpush.msra.mxu0 %v360
        %1043 = vmatpush.msra.mxu0 %v359
        %1044 = vmatpush.msra.mxu0 %v358
        %1045 = vmatmul.f32.gmra.mxu0 %v636
        %v1046 = vpop.f32.mrf.mxu0
        %v1047 = vadd.f32 0.0, %v1046
        %1048 = vmatmul.f32.gmra.mxu0 %v638
        %v1049 = vpop.f32.mrf.mxu0
        %v1050 = vadd.f32 0.0, %v1049
        %1051 = vmatmul.f32.gmra.mxu0 %v640
        %v1052 = vpop.f32.mrf.mxu0
        %v1053 = vadd.f32 0.0, %v1052
        %1054 = vmatmul.f32.gmra.mxu0 %v642
        %v1055 = vpop.f32.mrf.mxu0
        %v1056 = vadd.f32 0.0, %v1055
        %1057 = vmatmul.f32.gmra.mxu0 %v644
        %v1058 = vpop.f32.mrf.mxu0
        %v1059 = vadd.f32 0.0, %v1058
        %1060 = vmatmul.f32.gmra.mxu0 %v646
        %v1061 = vpop.f32.mrf.mxu0
        %v1062 = vadd.f32 0.0, %v1061
        %1063 = vmatmul.f32.gmra.mxu0 %v648
        %v1064 = vpop.f32.mrf.mxu0
        %v1065 = vadd.f32 0.0, %v1064
        %1066 = vmatmul.f32.gmra.mxu0 %v650
        %v1067 = vpop.f32.mrf.mxu0
        %v1068 = vadd.f32 0.0, %v1067
        %1069 = vmatmul.f32.gmra.mxu0 %v652
        %v1070 = vpop.f32.mrf.mxu0
        %v1071 = vadd.f32 0.0, %v1070
        %1072 = vmatmul.f32.gmra.mxu0 %v654
        %v1073 = vpop.f32.mrf.mxu0
        %v1074 = vadd.f32 0.0, %v1073
        %1075 = vmatmul.f32.gmra.mxu0 %v656
        %v1076 = vpop.f32.mrf.mxu0
        %v1077 = vadd.f32 0.0, %v1076
        %1078 = vmatmul.f32.gmra.mxu0 %v658
        %v1079 = vpop.f32.mrf.mxu0
        %v1080 = vadd.f32 0.0, %v1079
        %1081 = vmatmul.f32.gmra.mxu0 %v660
        %v1082 = vpop.f32.mrf.mxu0
        %v1083 = vadd.f32 0.0, %v1082
        %1084 = vmatmul.f32.gmra.mxu0 %v662
        %v1085 = vpop.f32.mrf.mxu0
        %v1086 = vadd.f32 0.0, %v1085
        %1087 = vmatmul.f32.gmra.mxu0 %v1024
        %v1088 = vpop.f32.mrf.mxu0
        %v1089 = vadd.f32 0.0, %v1088
        %1090 = vmatmul.f32.gmra.mxu0 %v1026
        %v1091 = vpop.f32.mrf.mxu0
        %v1092 = vadd.f32 0.0, %v1091
        %1093 = vdwg.mxu0
        %v1094 = vadd.f32 %v1005, %v1047
        %v1095 = vadd.f32 %v1006, %v1050
        %v1096 = vadd.f32 %v1007, %v1053
        %v1097 = vadd.f32 %v1008, %v1056
        %v1098 = vadd.f32 %v1009, %v1059
        %v1099 = vadd.f32 %v1010, %v1062
        %v1100 = vadd.f32 %v1011, %v1065
        %v1101 = vadd.f32 %v1012, %v1068
        %v1102 = vadd.f32 %v1013, %v1071
        %v1103 = vadd.f32 %v1014, %v1074
        %v1104 = vadd.f32 %v1015, %v1077
        %v1105 = vadd.f32 %v1016, %v1080
        %v1106 = vadd.f32 %v1017, %v1083
        %v1107 = vadd.f32 %v1018, %v1086
        %v1108 = vadd.f32 %v1019, %v1089
        %v1109 = vadd.f32 %v1020, %v1092
        %v1110 = vrot.slane %v608, 2
        %v1111 = vsel %vm809, %v841, %v1110
        %v1112 = vrot.slane %v609, 2
        %v1113 = vsel %vm809, %v1110, %v1112
        %1116 = vmatpush.msra.mxu0 %v389
        %1117 = vmatpush.msra.mxu0 %v388
        %1118 = vmatpush.msra.mxu0 %v387
        %1119 = vmatpush.msra.mxu0 %v386
        %1120 = vmatpush.msra.mxu0 %v385
        %1121 = vmatpush.msra.mxu0 %v384
        %1122 = vmatpush.msra.mxu0 %v383
        %1123 = vmatpush.msra.mxu0 %v382
        %1124 = vmatpush.msra.mxu0 %v381
        %1125 = vmatpush.msra.mxu0 %v380
        %1126 = vmatpush.msra.mxu0 %v379
        %1127 = vmatpush.msra.mxu0 %v378
        %1128 = vmatpush.msra.mxu0 %v377
        %1129 = vmatpush.msra.mxu0 %v376
        %1130 = vmatpush.msra.mxu0 %v375
        %1131 = vmatpush.msra.mxu0 %v374
        %1132 = vmatmul.f32.gmra.mxu0 %v816
        %v1133 = vpop.f32.mrf.mxu0
        %v1134 = vadd.f32 0.0, %v1133
        %1135 = vmatmul.f32.gmra.mxu0 %v818
        %v1136 = vpop.f32.mrf.mxu0
        %v1137 = vadd.f32 0.0, %v1136
        %1138 = vmatmul.f32.gmra.mxu0 %v820
        %v1139 = vpop.f32.mrf.mxu0
        %v1140 = vadd.f32 0.0, %v1139
        %1141 = vmatmul.f32.gmra.mxu0 %v822
        %v1142 = vpop.f32.mrf.mxu0
        %v1143 = vadd.f32 0.0, %v1142
        %1144 = vmatmul.f32.gmra.mxu0 %v824
        %v1145 = vpop.f32.mrf.mxu0
        %v1146 = vadd.f32 0.0, %v1145
        %1147 = vmatmul.f32.gmra.mxu0 %v826
        %v1148 = vpop.f32.mrf.mxu0
        %v1149 = vadd.f32 0.0, %v1148
        %1150 = vmatmul.f32.gmra.mxu0 %v828
        %v1151 = vpop.f32.mrf.mxu0
        %v1152 = vadd.f32 0.0, %v1151
        %1153 = vmatmul.f32.gmra.mxu0 %v830
        %v1154 = vpop.f32.mrf.mxu0
        %v1155 = vadd.f32 0.0, %v1154
        %1156 = vmatmul.f32.gmra.mxu0 %v832
        %v1157 = vpop.f32.mrf.mxu0
        %v1158 = vadd.f32 0.0, %v1157
        %1159 = vmatmul.f32.gmra.mxu0 %v834
        %v1160 = vpop.f32.mrf.mxu0
        %v1161 = vadd.f32 0.0, %v1160
        %1162 = vmatmul.f32.gmra.mxu0 %v836
        %v1163 = vpop.f32.mrf.mxu0
        %v1164 = vadd.f32 0.0, %v1163
        %1165 = vmatmul.f32.gmra.mxu0 %v838
        %v1166 = vpop.f32.mrf.mxu0
        %v1167 = vadd.f32 0.0, %v1166
        %1168 = vmatmul.f32.gmra.mxu0 %v840
        %v1169 = vpop.f32.mrf.mxu0
        %v1170 = vadd.f32 0.0, %v1169
        %1171 = vmatmul.f32.gmra.mxu0 %v842
        %v1172 = vpop.f32.mrf.mxu0
        %v1173 = vadd.f32 0.0, %v1172
        %1174 = vmatmul.f32.gmra.mxu0 %v1111
        %v1175 = vpop.f32.mrf.mxu0
        %v1176 = vadd.f32 0.0, %v1175
        %1177 = vmatmul.f32.gmra.mxu0 %v1113
        %v1178 = vpop.f32.mrf.mxu0
        %v1179 = vadd.f32 0.0, %v1178
        %1180 = vdwg.mxu0
        %v1181 = vadd.f32 %v1094, %v1134
        %v1182 = vadd.f32 %v1095, %v1137
        %v1183 = vadd.f32 %v1096, %v1140
        %v1184 = vadd.f32 %v1097, %v1143
        %v1185 = vadd.f32 %v1098, %v1146
        %v1186 = vadd.f32 %v1099, %v1149
        %v1187 = vadd.f32 %v1100, %v1152
        %v1188 = vadd.f32 %v1101, %v1155
        %v1189 = vadd.f32 %v1102, %v1158
        %v1190 = vadd.f32 %v1103, %v1161
        %v1191 = vadd.f32 %v1104, %v1164
        %v1192 = vadd.f32 %v1105, %v1167
        %v1193 = vadd.f32 %v1106, %v1170
        %v1194 = vadd.f32 %v1107, %v1173
        %v1195 = vadd.f32 %v1108, %v1176
        %v1196 = vadd.f32 %v1109, %v1179
        %1197 = vmatpush.msra.mxu0 %v405
        %1198 = vmatpush.msra.mxu0 %v404
        %1199 = vmatpush.msra.mxu0 %v403
        %1200 = vmatpush.msra.mxu0 %v402
        %1201 = vmatpush.msra.mxu0 %v401
        %1202 = vmatpush.msra.mxu0 %v400
        %1203 = vmatpush.msra.mxu0 %v399
        %1204 = vmatpush.msra.mxu0 %v398
        %1205 = vmatpush.msra.mxu0 %v397
        %1206 = vmatpush.msra.mxu0 %v396
        %1207 = vmatpush.msra.mxu0 %v395
        %1208 = vmatpush.msra.mxu0 %v394
        %1209 = vmatpush.msra.mxu0 %v393
        %1210 = vmatpush.msra.mxu0 %v392
        %1211 = vmatpush.msra.mxu0 %v391
        %1212 = vmatpush.msra.mxu0 %v390
        %1213 = vmatmul.f32.gmra.mxu0 %v595
        %v1214 = vpop.f32.mrf.mxu0
        %v1215 = vadd.f32 0.0, %v1214
        %1216 = vmatmul.f32.gmra.mxu0 %v596
        %v1217 = vpop.f32.mrf.mxu0
        %v1218 = vadd.f32 0.0, %v1217
        %1219 = vmatmul.f32.gmra.mxu0 %v597
        %v1220 = vpop.f32.mrf.mxu0
        %v1221 = vadd.f32 0.0, %v1220
        %1222 = vmatmul.f32.gmra.mxu0 %v598
        %v1223 = vpop.f32.mrf.mxu0
        %v1224 = vadd.f32 0.0, %v1223
        %1225 = vmatmul.f32.gmra.mxu0 %v599
        %v1226 = vpop.f32.mrf.mxu0
        %v1227 = vadd.f32 0.0, %v1226
        %1228 = vmatmul.f32.gmra.mxu0 %v600
        %v1229 = vpop.f32.mrf.mxu0
        %v1230 = vadd.f32 0.0, %v1229
        %1231 = vmatmul.f32.gmra.mxu0 %v601
        %v1232 = vpop.f32.mrf.mxu0
        %v1233 = vadd.f32 0.0, %v1232
        %1234 = vmatmul.f32.gmra.mxu0 %v602
        %v1235 = vpop.f32.mrf.mxu0
        %v1236 = vadd.f32 0.0, %v1235
        %1237 = vmatmul.f32.gmra.mxu0 %v603
        %v1238 = vpop.f32.mrf.mxu0
        %v1239 = vadd.f32 0.0, %v1238
        %1240 = vmatmul.f32.gmra.mxu0 %v604
        %v1241 = vpop.f32.mrf.mxu0
        %v1242 = vadd.f32 0.0, %v1241
        %1243 = vmatmul.f32.gmra.mxu0 %v605
        %v1244 = vpop.f32.mrf.mxu0
        %v1245 = vadd.f32 0.0, %v1244
        %1246 = vmatmul.f32.gmra.mxu0 %v606
        %v1247 = vpop.f32.mrf.mxu0
        %v1248 = vadd.f32 0.0, %v1247
        %1249 = vmatmul.f32.gmra.mxu0 %v607
        %v1250 = vpop.f32.mrf.mxu0
        %v1251 = vadd.f32 0.0, %v1250
        %1252 = vmatmul.f32.gmra.mxu0 %v608
        %v1253 = vpop.f32.mrf.mxu0
        %v1254 = vadd.f32 0.0, %v1253
        %1255 = vmatmul.f32.gmra.mxu0 %v609
        %v1256 = vpop.f32.mrf.mxu0
        %v1257 = vadd.f32 0.0, %v1256
        %1258 = vmatmul.f32.gmra.mxu0 %v610
        %v1259 = vpop.f32.mrf.mxu0
        %v1260 = vadd.f32 0.0, %v1259
        %1261 = vdwg.mxu0
        %v1262 = vadd.f32 %v1181, %v1215
        %v1263 = vadd.f32 %v1182, %v1218
        %v1264 = vadd.f32 %v1183, %v1221
        %v1265 = vadd.f32 %v1184, %v1224
        %v1266 = vadd.f32 %v1185, %v1227
        %v1267 = vadd.f32 %v1186, %v1230
        %v1268 = vadd.f32 %v1187, %v1233
        %v1269 = vadd.f32 %v1188, %v1236
        %v1270 = vadd.f32 %v1189, %v1239
        %v1271 = vadd.f32 %v1190, %v1242
        %v1272 = vadd.f32 %v1191, %v1245
        %v1273 = vadd.f32 %v1192, %v1248
        %v1274 = vadd.f32 %v1193, %v1251
        %v1275 = vadd.f32 %v1194, %v1254
        %v1276 = vadd.f32 %v1195, %v1257
        %v1277 = vadd.f32 %v1196, %v1260
        %v1280 = vrot.slane %v610, 1
        %v1281 = vsel %vm629, %v1025, %v1280
        %v1282 = vrot.slane %v611, 1
        %v1283 = vsel %vm629, %v1280, %v1282
        %1286 = vmatpush.msra.mxu0 %v421
        %1287 = vmatpush.msra.mxu0 %v420
        %1288 = vmatpush.msra.mxu0 %v419
        %1289 = vmatpush.msra.mxu0 %v418
        %1290 = vmatpush.msra.mxu0 %v417
        %1291 = vmatpush.msra.mxu0 %v416
        %1292 = vmatpush.msra.mxu0 %v415
        %1293 = vmatpush.msra.mxu0 %v414
        %1294 = vmatpush.msra.mxu0 %v413
        %1295 = vmatpush.msra.mxu0 %v412
        %1296 = vmatpush.msra.mxu0 %v411
        %1297 = vmatpush.msra.mxu0 %v410
        %1298 = vmatpush.msra.mxu0 %v409
        %1299 = vmatpush.msra.mxu0 %v408
        %1300 = vmatpush.msra.mxu0 %v407
        %1301 = vmatpush.msra.mxu0 %v406
        %1302 = vmatmul.f32.gmra.mxu0 %v640
        %v1303 = vpop.f32.mrf.mxu0
        %v1304 = vadd.f32 0.0, %v1303
        %1305 = vmatmul.f32.gmra.mxu0 %v642
        %v1306 = vpop.f32.mrf.mxu0
        %v1307 = vadd.f32 0.0, %v1306
        %1308 = vmatmul.f32.gmra.mxu0 %v644
        %v1309 = vpop.f32.mrf.mxu0
        %v1310 = vadd.f32 0.0, %v1309
        %1311 = vmatmul.f32.gmra.mxu0 %v646
        %v1312 = vpop.f32.mrf.mxu0
        %v1313 = vadd.f32 0.0, %v1312
        %1314 = vmatmul.f32.gmra.mxu0 %v648
        %v1315 = vpop.f32.mrf.mxu0
        %v1316 = vadd.f32 0.0, %v1315
        %1317 = vmatmul.f32.gmra.mxu0 %v650
        %v1318 = vpop.f32.mrf.mxu0
        %v1319 = vadd.f32 0.0, %v1318
        %1320 = vmatmul.f32.gmra.mxu0 %v652
        %v1321 = vpop.f32.mrf.mxu0
        %v1322 = vadd.f32 0.0, %v1321
        %1323 = vmatmul.f32.gmra.mxu0 %v654
        %v1324 = vpop.f32.mrf.mxu0
        %v1325 = vadd.f32 0.0, %v1324
        %1326 = vmatmul.f32.gmra.mxu0 %v656
        %v1327 = vpop.f32.mrf.mxu0
        %v1328 = vadd.f32 0.0, %v1327
        %1329 = vmatmul.f32.gmra.mxu0 %v658
        %v1330 = vpop.f32.mrf.mxu0
        %v1331 = vadd.f32 0.0, %v1330
        %1332 = vmatmul.f32.gmra.mxu0 %v660
        %v1333 = vpop.f32.mrf.mxu0
        %v1334 = vadd.f32 0.0, %v1333
        %1335 = vmatmul.f32.gmra.mxu0 %v662
        %v1336 = vpop.f32.mrf.mxu0
        %v1337 = vadd.f32 0.0, %v1336
        %1338 = vmatmul.f32.gmra.mxu0 %v1024
        %v1339 = vpop.f32.mrf.mxu0
        %v1340 = vadd.f32 0.0, %v1339
        %1341 = vmatmul.f32.gmra.mxu0 %v1026
        %v1342 = vpop.f32.mrf.mxu0
        %v1343 = vadd.f32 0.0, %v1342
        %1344 = vmatmul.f32.gmra.mxu0 %v1281
        %v1345 = vpop.f32.mrf.mxu0
        %v1346 = vadd.f32 0.0, %v1345
        %1347 = vmatmul.f32.gmra.mxu0 %v1283
        %v1348 = vpop.f32.mrf.mxu0
        %v1349 = vadd.f32 0.0, %v1348
        %1350 = vdwg.mxu0
        %v1351 = vadd.f32 %v1262, %v1304
        %v1352 = vadd.f32 %v1263, %v1307
        %v1353 = vadd.f32 %v1264, %v1310
        %v1354 = vadd.f32 %v1265, %v1313
        %v1355 = vadd.f32 %v1266, %v1316
        %v1356 = vadd.f32 %v1267, %v1319
        %v1357 = vadd.f32 %v1268, %v1322
        %v1358 = vadd.f32 %v1269, %v1325
        %v1359 = vadd.f32 %v1270, %v1328
        %v1360 = vadd.f32 %v1271, %v1331
        %v1361 = vadd.f32 %v1272, %v1334
        %v1362 = vadd.f32 %v1273, %v1337
        %v1363 = vadd.f32 %v1274, %v1340
        %v1364 = vadd.f32 %v1275, %v1343
        %v1365 = vadd.f32 %v1276, %v1346
        %v1366 = vadd.f32 %v1277, %v1349
        %v1367 = vrot.slane %v610, 2
        %v1368 = vsel %vm809, %v1112, %v1367
        %v1369 = vrot.slane %v611, 2
        %v1370 = vsel %vm809, %v1367, %v1369
        %1373 = vmatpush.msra.mxu0 %v437
        %1374 = vmatpush.msra.mxu0 %v436
        %1375 = vmatpush.msra.mxu0 %v435
        %1376 = vmatpush.msra.mxu0 %v434
        %1377 = vmatpush.msra.mxu0 %v433
        %1378 = vmatpush.msra.mxu0 %v432
        %1379 = vmatpush.msra.mxu0 %v431
        %1380 = vmatpush.msra.mxu0 %v430
        %1381 = vmatpush.msra.mxu0 %v429
        %1382 = vmatpush.msra.mxu0 %v428
        %1383 = vmatpush.msra.mxu0 %v427
        %1384 = vmatpush.msra.mxu0 %v426
        %1385 = vmatpush.msra.mxu0 %v425
        %1386 = vmatpush.msra.mxu0 %v424
        %1387 = vmatpush.msra.mxu0 %v423
        %1388 = vmatpush.msra.mxu0 %v422
        %1389 = vmatmul.f32.gmra.mxu0 %v820
        %v1390 = vpop.f32.mrf.mxu0
        %v1391 = vadd.f32 0.0, %v1390
        %1392 = vmatmul.f32.gmra.mxu0 %v822
        %v1393 = vpop.f32.mrf.mxu0
        %v1394 = vadd.f32 0.0, %v1393
        %1395 = vmatmul.f32.gmra.mxu0 %v824
        %v1396 = vpop.f32.mrf.mxu0
        %v1397 = vadd.f32 0.0, %v1396
        %1398 = vmatmul.f32.gmra.mxu0 %v826
        %v1399 = vpop.f32.mrf.mxu0
        %v1400 = vadd.f32 0.0, %v1399
        %1401 = vmatmul.f32.gmra.mxu0 %v828
        %v1402 = vpop.f32.mrf.mxu0
        %v1403 = vadd.f32 0.0, %v1402
        %1404 = vmatmul.f32.gmra.mxu0 %v830
        %v1405 = vpop.f32.mrf.mxu0
        %v1406 = vadd.f32 0.0, %v1405
        %1407 = vmatmul.f32.gmra.mxu0 %v832
        %v1408 = vpop.f32.mrf.mxu0
        %v1409 = vadd.f32 0.0, %v1408
        %1410 = vmatmul.f32.gmra.mxu0 %v834
        %v1411 = vpop.f32.mrf.mxu0
        %v1412 = vadd.f32 0.0, %v1411
        %1413 = vmatmul.f32.gmra.mxu0 %v836
        %v1414 = vpop.f32.mrf.mxu0
        %v1415 = vadd.f32 0.0, %v1414
        %1416 = vmatmul.f32.gmra.mxu0 %v838
        %v1417 = vpop.f32.mrf.mxu0
        %v1418 = vadd.f32 0.0, %v1417
        %1419 = vmatmul.f32.gmra.mxu0 %v840
        %v1420 = vpop.f32.mrf.mxu0
        %v1421 = vadd.f32 0.0, %v1420
        %1422 = vmatmul.f32.gmra.mxu0 %v842
        %v1423 = vpop.f32.mrf.mxu0
        %v1424 = vadd.f32 0.0, %v1423
        %1425 = vmatmul.f32.gmra.mxu0 %v1111
        %v1426 = vpop.f32.mrf.mxu0
        %v1427 = vadd.f32 0.0, %v1426
        %1428 = vmatmul.f32.gmra.mxu0 %v1113
        %v1429 = vpop.f32.mrf.mxu0
        %v1430 = vadd.f32 0.0, %v1429
        %1431 = vmatmul.f32.gmra.mxu0 %v1368
        %v1432 = vpop.f32.mrf.mxu0
        %v1433 = vadd.f32 0.0, %v1432
        %1434 = vmatmul.f32.gmra.mxu0 %v1370
        %v1435 = vpop.f32.mrf.mxu0
        %v1436 = vadd.f32 0.0, %v1435
        %1437 = vdwg.mxu0
        %v1438 = vadd.f32 %v1351, %v1391
        %v1439 = vadd.f32 %v1352, %v1394
        %v1440 = vadd.f32 %v1353, %v1397
        %v1441 = vadd.f32 %v1354, %v1400
        %v1442 = vadd.f32 %v1355, %v1403
        %v1443 = vadd.f32 %v1356, %v1406
        %v1444 = vadd.f32 %v1357, %v1409
        %v1445 = vadd.f32 %v1358, %v1412
        %v1446 = vadd.f32 %v1359, %v1415
        %v1447 = vadd.f32 %v1360, %v1418
        %v1448 = vadd.f32 %v1361, %v1421
        %v1449 = vadd.f32 %v1362, %v1424
        %v1450 = vadd.f32 %v1363, %v1427
        %v1451 = vadd.f32 %v1364, %v1430
        %v1452 = vadd.f32 %v1365, %v1433
        %v1453 = vadd.f32 %v1366, %v1436
        %v1455 = vperm.slane %v439, 0
        %v1457 = vadd.f32 %v1438, %v1455
        %v1458 = vadd.f32 %v1439, %v1455
        %v1459 = vadd.f32 %v1440, %v1455
        %v1460 = vadd.f32 %v1441, %v1455
        %v1461 = vadd.f32 %v1442, %v1455
        %v1462 = vadd.f32 %v1443, %v1455
        %v1463 = vadd.f32 %v1444, %v1455
        %v1464 = vadd.f32 %v1445, %v1455
        %v1465 = vadd.f32 %v1446, %v1455
        %v1466 = vadd.f32 %v1447, %v1455
        %v1467 = vadd.f32 %v1448, %v1455
        %v1468 = vadd.f32 %v1449, %v1455
        %v1469 = vadd.f32 %v1450, %v1455
        %v1470 = vadd.f32 %v1451, %v1455
        %v1471 = vadd.f32 %v1452, %v1455
        %v1472 = vadd.f32 %v1453, %v1455
        %v1473 = vmax.f32 %v1457, 0.0
        %v1474 = vmax.f32 %v1458, 0.0
        %v1475 = vmax.f32 %v1459, 0.0
        %v1476 = vmax.f32 %v1460, 0.0
        %v1477 = vmax.f32 %v1461, 0.0
        %v1478 = vmax.f32 %v1462, 0.0
        %v1479 = vmax.f32 %v1463, 0.0
        %v1480 = vmax.f32 %v1464, 0.0
        %v1481 = vmax.f32 %v1465, 0.0
        %v1482 = vmax.f32 %v1466, 0.0
        %v1483 = vmax.f32 %v1467, 0.0
        %v1484 = vmax.f32 %v1468, 0.0
        %v1485 = vmax.f32 %v1469, 0.0
        %v1486 = vmax.f32 %v1470, 0.0
        %v1487 = vmax.f32 %v1471, 0.0
        %v1488 = vmax.f32 %v1472, 0.0
        %v1489 = vmax.f32 %v1473, %v1475
        %v1490 = vmax.f32 %v1474, %v1476
        %v1491 = vmax.f32 %v1477, %v1479
        %v1492 = vmax.f32 %v1478, %v1480
        %v1493 = vmax.f32 %v1481, %v1483
        %v1494 = vmax.f32 %v1482, %v1484
        %v1495 = vmax.f32 %v1485, %v1487
        %v1496 = vmax.f32 %v1486, %v1488
        %v1505 = vrot.slane %v1489, 2
        %v1506 = vrot.slane %v1489, 4
        %v1507 = vrot.slane %v1489, 6
        %v1508 = vrot.slane %v1490, 2
        %v1509 = vrot.slane %v1491, 2
        %v1510 = vrot.slane %v1491, 4
        %v1511 = vrot.slane %v1491, 6
        %v1512 = vrot.slane %v1492, 2
        %v1513 = vrot.slane %v1493, 2
        %v1514 = vrot.slane %v1493, 4
        %v1515 = vrot.slane %v1493, 6
        %v1516 = vrot.slane %v1494, 2
        %v1517 = vrot.slane %v1495, 2
        %v1518 = vrot.slane %v1495, 4
        %v1519 = vrot.slane %v1495, 6
        %v1520 = vrot.slane %v1496, 2
        %v1537 = vrot.slane %v1489, 7
        %v1538 = vrot.slane %v1537, 2
        %v1539 = vrot.slane %v1505, 7
        %v1540 = vrot.slane %v1539, 2
        %v1541 = vrot.slane %v1506, 7
        %v1542 = vrot.slane %v1541, 2
        %v1543 = vrot.slane %v1507, 7
        %v1544 = vrot.slane %v1543, 2
        %v1545 = vrot.slane %v1490, 7
        %v1546 = vrot.slane %v1545, 2
        %v1547 = vrot.slane %v1508, 7
        %v1548 = vrot.slane %v1547, 2
        %v1549 = vrot.slane %v1491, 7
        %v1550 = vrot.slane %v1549, 2
        %v1551 = vrot.slane %v1509, 7
        %v1552 = vrot.slane %v1551, 2
        %v1553 = vrot.slane %v1510, 7
        %v1554 = vrot.slane %v1553, 2
        %v1555 = vrot.slane %v1511, 7
        %v1556 = vrot.slane %v1555, 2
        %v1557 = vrot.slane %v1492, 7
        %v1558 = vrot.slane %v1557, 2
        %v1559 = vrot.slane %v1512, 7
        %v1560 = vrot.slane %v1559, 2
        %v1561 = vrot.slane %v1493, 7
        %v1562 = vrot.slane %v1561, 2
        %v1563 = vrot.slane %v1513, 7
        %v1564 = vrot.slane %v1563, 2
        %v1565 = vrot.slane %v1514, 7
        %v1566 = vrot.slane %v1565, 2
        %v1567 = vrot.slane %v1515, 7
        %v1568 = vrot.slane %v1567, 2
        %v1569 = vrot.slane %v1494, 7
        %v1570 = vrot.slane %v1569, 2
        %v1571 = vrot.slane %v1516, 7
        %v1572 = vrot.slane %v1571, 2
        %v1573 = vrot.slane %v1495, 7
        %v1574 = vrot.slane %v1573, 2
        %v1575 = vrot.slane %v1517, 7
        %v1576 = vrot.slane %v1575, 2
        %v1577 = vrot.slane %v1518, 7
        %v1578 = vrot.slane %v1577, 2
        %v1579 = vrot.slane %v1519, 7
        %v1580 = vrot.slane %v1579, 2
        %v1581 = vrot.slane %v1496, 7
        %v1582 = vrot.slane %v1581, 2
        %v1583 = vrot.slane %v1520, 7
        %v1584 = vrot.slane %v1583, 2
        %v1609 = vmax.f32 %v1489, %v1538
        %v1610 = vmax.f32 %v1505, %v1540
        %v1611 = vmax.f32 %v1506, %v1542
        %v1612 = vmax.f32 %v1507, %v1544
        %v1613 = vmax.f32 %v1490, %v1546
        %v1614 = vmax.f32 %v1508, %v1548
        %v1615 = vmax.f32 %v1491, %v1550
        %v1616 = vmax.f32 %v1509, %v1552
        %v1617 = vmax.f32 %v1510, %v1554
        %v1618 = vmax.f32 %v1511, %v1556
        %v1619 = vmax.f32 %v1492, %v1558
        %v1620 = vmax.f32 %v1512, %v1560
        %v1621 = vmax.f32 %v1493, %v1562
        %v1622 = vmax.f32 %v1513, %v1564
        %v1623 = vmax.f32 %v1514, %v1566
        %v1624 = vmax.f32 %v1515, %v1568
        %v1625 = vmax.f32 %v1494, %v1570
        %v1626 = vmax.f32 %v1516, %v1572
        %v1627 = vmax.f32 %v1495, %v1574
        %v1628 = vmax.f32 %v1517, %v1576
        %v1629 = vmax.f32 %v1518, %v1578
        %v1630 = vmax.f32 %v1519, %v1580
        %v1631 = vmax.f32 %v1496, %v1582
        %v1632 = vmax.f32 %v1520, %v1584
        %v1657 = vperm.slane %v1609, 0
        %v1658 = vperm.slane %v1610, 0
        %v1659 = vperm.slane %v1611, 0
        %v1660 = vperm.slane %v1612, 0
        %v1661 = vperm.slane %v1613, 0
        %v1662 = vperm.slane %v1614, 0
        %v1663 = vperm.slane %v1615, 0
        %v1664 = vperm.slane %v1616, 0
        %v1665 = vperm.slane %v1617, 0
        %v1666 = vperm.slane %v1618, 0
        %v1667 = vperm.slane %v1619, 0
        %v1668 = vperm.slane %v1620, 0
        %v1669 = vperm.slane %v1621, 0
        %v1670 = vperm.slane %v1622, 0
        %v1671 = vperm.slane %v1623, 0
        %v1672 = vperm.slane %v1624, 0
        %v1673 = vperm.slane %v1625, 0
        %v1674 = vperm.slane %v1626, 0
        %v1675 = vperm.slane %v1627, 0
        %v1676 = vperm.slane %v1628, 0
        %v1677 = vperm.slane %v1629, 0
        %v1678 = vperm.slane %v1630, 0
        %v1679 = vperm.slane %v1631, 0
        %v1680 = vperm.slane %v1632, 0
        %vm1681 = vcmask 1041409
        %v1682 = vsel %vm1681, %v1658, %v1657
        %vm1683 = vcmask 1042434
        %v1684 = vsel %vm1683, %v1659, %v1682
        %vm1685 = vcmask 1043459
        %v1686 = vsel %vm1685, %v1660, %v1684
        %vm1687 = vcmask 1044484
        %v1688 = vsel %vm1687, %v1661, %v1686
        %vm1689 = vcmask 1045509
        %v1690 = vsel %vm1689, %v1662, %v1688
        %vm1691 = vcmask 1046534
        %v1692 = vsel %vm1691, %v1663, %v1690
        %vm1693 = vcmask 1047559
        %v1694 = vsel %vm1693, %v1664, %v1692
        %v1695 = vsel %vm1681, %v1666, %v1665
        %v1696 = vsel %vm1683, %v1667, %v1695
        %v1697 = vsel %vm1685, %v1668, %v1696
        %v1698 = vsel %vm1687, %v1669, %v1697
        %v1699 = vsel %vm1689, %v1670, %v1698
        %v1700 = vsel %vm1691, %v1671, %v1699
        %v1701 = vsel %vm1693, %v1672, %v1700
        %v1702 = vsel %vm1681, %v1674, %v1673
        %v1703 = vsel %vm1683, %v1675, %v1702
        %v1704 = vsel %vm1685, %v1676, %v1703
        %v1705 = vsel %vm1687, %v1677, %v1704
        %v1706 = vsel %vm1689, %v1678, %v1705
        %v1707 = vsel %vm1691, %v1679, %v1706
        %v1708 = vsel %vm1693, %v1680, %v1707
        %1712 = vst [vmem:[%s258] sm:$0xff] %v1694
        %1713 = vst [vmem:[%s258 + $0x8] sm:$0xff] %v1701
        %1714 = vst [vmem:[%s258 + $0x10] sm:$0xff] %v1708
        %s1715 = sand.u32 %s154, 1
        %s1716 = scalar_lea.sflag [#allocation4], %s1715
        %s1717 = sand.u32 %s154, 1
        %s1718 = smul.addr %s1717, 24
        %s1719 = scalar_lea.vmem [#allocation5], %s1718
        // Predicated region
        $region45: #{tpu_custom_call.1} parent=39 // pred_check
          %p1720 = pneg %p164
        $region46: #{tpu_custom_call.1} parent=39 // pred_check_branch
          %1722 = sbr.rel (%p1720) target = $region48
        $region47: #{tpu_custom_call.1} parent=39 // pred_region
          %1724 = vsyncadd %s1716, 0
          %s1725 = smul.addr %s25, 3
          %s1726 = smul.addr %s24, 6
          %s1727 = sadd.s32 %s1725, %s1726
          %s1728 = smul.addr %s1727, 8
          %s1729 = scalar_lea.hbm %s5, %s1728
          %s1730 = sshll.u32 %s1719, 4
          %s1731 = int_to_ptr.vmem [resolvable:$true] %s1730
          %s1732 = sshll.u32 %s1729, 4
          %s1733 = int_to_ptr.hbm [resolvable:$true] %s1732
          %1738 = dma.vmem_to_hbm [thread:$0]  %s1731, 384, %s1733, %s1716, 128, 128, 8
        $region48: #{tpu_custom_call.1} parent=39 // pred_fallthru
          _
      $region40: #{tpu_custom_call.1} parent=5 // pred_fallthru
        _
      %p1739 = scmp.le.s32.totalorder 2, %s15
      // Predicated region
      $region49: #{tpu_custom_call.1} parent=5 // pred_check
        %p1740 = pneg %p1739
      $region50: #{tpu_custom_call.1} parent=5 // pred_check_branch
        %1742 = sbr.rel (%p1740) target = $region52
      $region51: #{tpu_custom_call.1} parent=5 // pred_region
        %s1743 = ssub.s32 %s15, 2
        // Predicated region
        $region53: #{tpu_custom_call.1} parent=51 // pred_check
          %p1744 = pneg %p170
        $region54: #{tpu_custom_call.1} parent=51 // pred_check_branch
          %1746 = sbr.rel (%p1744) target = $region56
        $region55: #{tpu_custom_call.1} parent=51 // pred_region
          %s1747 = sand.u32 %s155, 1
          %s1748 = scalar_lea.sflag [#allocation4], %s1747
          %s1749 = sand.u32 %s155, 1
          %s1750 = smul.addr %s1749, 24
          %s1751 = scalar_lea.vmem [#allocation5], %s1750
          %1753 = dma.done %s1748, 384
        $region56: #{tpu_custom_call.1} parent=51 // pred_fallthru
          _
      $region52: #{tpu_custom_call.1} parent=5 // pred_fallthru
        _
    $region6: #{tpu_custom_call.1} parent=1 // loop_footer
      %s19 = sadd.s32 1, %s15
    $region7: #{tpu_custom_call.1} parent=1 // loop_footer_branch
      %14 = sbr.rel target = $region3
    $region8: #{tpu_custom_call.1} parent=1 // loop_exit
      _
    %1754 = vsyncpa [#allocation3], 1
    %s1755 = scalar_lea.sflag [#allocation3], 1
    %1756 = vsyncpa %s1755, 1
    %1757 = vsyncpa [#allocation4], 1
    %s1758 = scalar_lea.sflag [#allocation4], 1
    %1759 = vsyncpa %s1758, 1

</llo_original>
